<compile_context>
chip_gen: v7x
topology: tpu7x:2x2x1
jax: 0.10.0
libtpu: 0.0.40
codegen_flags: <defaults>
</compile_context>

<pallas_src>
import functools

import jax
import jax.numpy as jnp
from jax.experimental import pallas as pl
from jax.experimental.pallas import tpu as pltpu

BN_EPS = 1e-5

# Grid steps over the batch/lane axis: 2 = one step per TensorCore on v7x;
# use 1 on single-TC v5e/v6e if the extra per-step overhead matters.
NUM_GRID_STEPS = 2


# ---------------------------------------------------------------------------
# Fused kernel: all DepthWise blocks for one (C, L) lane-dense slab.
# ---------------------------------------------------------------------------
def _residual_kernel(x_ref, w1_ref, b1_ref, a1_ref, wdw_ref, b2_ref, a2_ref,
                     w3_ref, b3_ref, o_ref, *, blocks, W, L):
    cur = x_ref[...]                                        # (C, L) float32

    # TODO(synk): for configs with many blocks / larger C,G,HW, move `blocks`
    # onto an "arbitrary" grid axis (per-block weight index_map + VMEM
    # residual scratch) instead of this unrolled Python loop, and set
    # vmem_limit_bytes explicitly (v7x has 64 MiB VMEM).
    for blk in range(blocks):
        # --- ConvBlock 1: 1x1 conv (BN scale folded into w1) -> +bias -> PReLU
        y = jnp.dot(w1_ref[blk], cur.astype(jnp.bfloat16),
                    preferred_element_type=jnp.float32)     # (G, L)
        y = y + b1_ref[blk]
        y = jnp.where(y > 0, y, y * a1_ref[blk])

        # --- ConvBlock 2: 3x3 depthwise conv (pad 1, stride 1).  Boundary
        #     masks and BN scale are pre-folded into wdw_ref, so each tap is a
        #     static lane rotation (XLU) + one FMA (VPU).
        acc = y * wdw_ref[blk, 4]                           # center tap
        for t in range(9):
            if t == 4:
                continue
            off = (t // 3 - 1) * W + (t % 3 - 1)
            shifted = pltpu.roll(y, shift=(-off) % L, axis=1)
            acc = acc + shifted * wdw_ref[blk, t]
        y = acc + b2_ref[blk]
        y = jnp.where(y > 0, y, y * a2_ref[blk])

        # --- LinearBlock: 1x1 conv (BN scale folded) -> +bias -> residual add
        z = jnp.dot(w3_ref[blk], y.astype(jnp.bfloat16),
                    preferred_element_type=jnp.float32)     # (C, L)
        cur = z + b3_ref[blk] + cur

    o_ref[...] = cur


# ---------------------------------------------------------------------------
# Wrapper
# ---------------------------------------------------------------------------
@jax.jit
def residual_forward_nchw(x_nchw, kp):
    N, C, H, W = x_nchw.shape
    HW = H * W
    blocks = kp["w1"].shape[0]

    steps = NUM_GRID_STEPS if (N >= NUM_GRID_STEPS and N % NUM_GRID_STEPS == 0) else 1
    Nb = N // steps
    L = Nb * HW                                             # lanes per grid step

    # Channel-first lane-dense layout: lanes = N*HW (multiple of 128).
    x2 = jnp.transpose(x_nchw.reshape(N, C, HW), (1, 0, 2)).reshape(C, N * HW)
    # Per-tap masked+scaled weights, tiled to the per-step lane width.  The
    # mask pattern repeats per image, so rolls across image seams are zeroed.
    wdw = jnp.tile(kp["w_dw_masked"], (1, 1, 1, Nb))        # (blocks, 9, G, L)

    kernel = functools.partial(_residual_kernel, blocks=blocks, W=W, L=L)

    def full(arr):
        nd = arr.ndim
        return pl.BlockSpec(arr.shape, lambda s, _nd=nd: (0,) * _nd)

    out = pl.pallas_call(
        kernel,
        out_shape=jax.ShapeDtypeStruct((C, N * HW), jnp.float32),
        grid=(steps,),
        in_specs=[
            pl.BlockSpec((C, L), lambda s: (0, s)),         # x (lane-dense)
            full(kp["w1"]), full(kp["b1"]), full(kp["a1"]),
            full(wdw), full(kp["b2"]), full(kp["a2"]),
            full(kp["w3"]), full(kp["b3"]),
        ],
        out_specs=pl.BlockSpec((C, L), lambda s: (0, s)),
        input_output_aliases={0: 0},                        # reuse x2's buffer
        compiler_params=pltpu.CompilerParams(
            dimension_semantics=("parallel",)),
    )(x2, kp["w1"], kp["b1"], kp["a1"], wdw, kp["b2"], kp["a2"],
      kp["w3"], kp["b3"])

    return out.reshape(C, N, HW).transpose(1, 0, 2).reshape(N, C, H, W)


# ---------------------------------------------------------------------------
# Parameters
# ---------------------------------------------------------------------------
def _fold_bn(gamma, beta, mean, var):
    scale = gamma / jnp.sqrt(var + BN_EPS)
    bias = beta - mean * scale
    return scale, bias


def init_raw_params(key, channel, groups, blocks):
    """PyTorch-style parameters: conv weights, BN stats, PReLU slopes."""
    def bn(k, c):
        k1, k2, k3, k4 = jax.random.split(k, 4)
        return dict(
            gamma=1.0 + 0.1 * jax.random.normal(k1, (blocks, c), jnp.float32),
            beta=0.1 * jax.random.normal(k2, (blocks, c), jnp.float32),
            mean=0.1 * jax.random.normal(k3, (blocks, c), jnp.float32),
            var=1.0 + 0.1 * jnp.abs(jax.random.normal(k4, (blocks, c), jnp.float32)),
        )

    keys = jax.random.split(key, 8)
    return {
        # 1x1 conv (C -> G): PyTorch weight layout (out, in) = (G, C)
        "w1": 0.1 * jax.random.normal(keys[0], (blocks, groups, channel), jnp.float32),
        "bn1": bn(keys[1], groups),
        "alpha1": 0.25 + 0.01 * jax.random.normal(keys[2], (blocks, groups), jnp.float32),
        # 3x3 depthwise conv: (G, 9) taps, t = dh*3 + dw
        "w_dw": 0.1 * jax.random.normal(keys[3], (blocks, groups, 9), jnp.float32),
        "bn2": bn(keys[4], groups),
        "alpha2": 0.25 + 0.01 * jax.random.normal(keys[5], (blocks, groups), jnp.float32),
        # 1x1 conv (G -> C): (out, in) = (C, G)
        "w3": 0.1 * jax.random.normal(keys[6], (blocks, channel, groups), jnp.float32),
        "bn3": bn(keys[7], channel),
    }


def prepare_kernel_params(raw, H, W):
    """Fold inference-mode BN scales into the conv weights, fold the 3x3
    boundary masks into per-tap depthwise weights, pre-cast matmul weights to
    bf16.  Everything here is one-time wrapper-side prep."""
    HW = H * W
    s1, b1 = _fold_bn(**raw["bn1"])
    s2, b2 = _fold_bn(**raw["bn2"])
    s3, b3 = _fold_bn(**raw["bn3"])

    # Boundary masks for the 9 depthwise taps on a flattened (H*W,) image.
    pos = jnp.arange(HW)
    hh, ww = pos // W, pos % W
    masks = []
    for t in range(9):
        dh, dw = t // 3 - 1, t % 3 - 1
        m = (hh + dh >= 0) & (hh + dh < H) & (ww + dw >= 0) & (ww + dw < W)
        masks.append(m.astype(jnp.float32))
    mask = jnp.stack(masks)                                  # (9, HW)

    wdw_scaled = raw["w_dw"] * s2[:, :, None]                # (blocks, G, 9)
    w_dw_masked = (jnp.transpose(wdw_scaled, (0, 2, 1))[..., None]
                   * mask[None, :, None, :])                 # (blocks, 9, G, HW)

    return {
        "w1": (raw["w1"] * s1[..., None]).astype(jnp.bfloat16),
        "b1": b1[..., None],
        "a1": raw["alpha1"][..., None],
        "w_dw_masked": w_dw_masked,
        "b2": b2[..., None],
        "a2": raw["alpha2"][..., None],
        "w3": (raw["w3"] * s3[..., None]).astype(jnp.bfloat16),
        "b3": b3[..., None],
    }


# ---------------------------------------------------------------------------
# Pure-JAX f32 reference (independent pad-and-slice formulation).
# ---------------------------------------------------------------------------
def _ref_forward_nchw(x_nchw, raw):
    x = x_nchw
    N, C, H, W = x.shape
    blocks, G, _ = raw["w1"].shape
    s1, b1 = _fold_bn(**raw["bn1"])
    s2, b2 = _fold_bn(**raw["bn2"])
    s3, b3 = _fold_bn(**raw["bn3"])
    for b in range(blocks):
        y = jnp.einsum("gc,nchw->nghw", raw["w1"][b], x)
        y = y * s1[b].reshape(1, G, 1, 1) + b1[b].reshape(1, G, 1, 1)
        y = jnp.where(y > 0, y, y * raw["alpha1"][b].reshape(1, G, 1, 1))

        yp = jnp.pad(y, ((0, 0), (0, 0), (1, 1), (1, 1)))
        wdw = raw["w_dw"][b].reshape(G, 3, 3)
        acc = jnp.zeros_like(y)
        for dh in range(3):
            for dw in range(3):
                acc = acc + (yp[:, :, dh:dh + H, dw:dw + W]
                             * wdw[:, dh, dw].reshape(1, G, 1, 1))
        y = acc * s2[b].reshape(1, G, 1, 1) + b2[b].reshape(1, G, 1, 1)
        y = jnp.where(y > 0, y, y * raw["alpha2"][b].reshape(1, G, 1, 1))

        z = jnp.einsum("cg,nghw->nchw", raw["w3"][b], y)
        z = z * s3[b].reshape(1, C, 1, 1) + b3[b].reshape(1, C, 1, 1)
        x = z + x
    return x


if __name__ == "__main__":
    # Residual(channel=8, blocks=2, groups=16), input NCHW (2, 8, 16, 16)
    channel, blocks, groups = 8, 2, 16
    N, H, W = 2, 16, 16

    key = jax.random.PRNGKey(0)
    kx, kp = jax.random.split(key)
    x = jax.random.normal(kx, (N, channel, H, W), jnp.float32)

    raw = init_raw_params(kp, channel, groups, blocks)
    kparams = prepare_kernel_params(raw, H, W)

    out = jax.block_until_ready(residual_forward_nchw(x, kparams))

    ref = _ref_forward_nchw(x, raw)
    assert out.shape == (N, channel, H, W)
    # bf16 matmul operands in the kernel (f32 accumulation) vs. pure-f32 ref:
    # expected max deviation well under 1e-2 at these scales.
    assert jnp.allclose(out, ref, atol=1e-2, rtol=1e-2), "mismatch vs reference"
    print("KERNEL_OK")
</pallas_src>

<mosaic_0001>
module attributes {stable_mosaic.version = 11 : i64} {
  func.func @_residual_kernel(%arg0: i32, %arg1: memref<8x256xf32, #tpu.memory_space<vmem>>, %arg2: memref<2x16x8xbf16, #tpu.memory_space<vmem>>, %arg3: memref<2x16x1xf32, #tpu.memory_space<vmem>>, %arg4: memref<2x16x1xf32, #tpu.memory_space<vmem>>, %arg5: memref<2x9x16x256xf32, #tpu.memory_space<vmem>>, %arg6: memref<2x16x1xf32, #tpu.memory_space<vmem>>, %arg7: memref<2x16x1xf32, #tpu.memory_space<vmem>>, %arg8: memref<2x8x16xbf16, #tpu.memory_space<vmem>>, %arg9: memref<2x8x1xf32, #tpu.memory_space<vmem>>, %arg10: memref<8x256xf32, #tpu.memory_space<vmem>>) attributes {dimension_semantics = [#tpu.dimension_semantics<parallel>], iteration_bounds = array<i64: 2>, scalar_prefetch = 0 : i64, scratch_operands = 0 : i64, tpu.core_type = #tpu.core_type<tc>, window_params = [{transform_indices = @transform_0, window_bounds = array<i64: 8, 256>}, {pipeline_mode = #tpu.pipeline_mode<synchronous>, transform_indices = @transform_1, window_bounds = array<i64: 2, 16, 8>}, {pipeline_mode = #tpu.pipeline_mode<synchronous>, transform_indices = @transform_2, window_bounds = array<i64: 2, 16, 1>}, {pipeline_mode = #tpu.pipeline_mode<synchronous>, transform_indices = @transform_3, window_bounds = array<i64: 2, 16, 1>}, {pipeline_mode = #tpu.pipeline_mode<synchronous>, transform_indices = @transform_4, window_bounds = array<i64: 2, 9, 16, 256>}, {pipeline_mode = #tpu.pipeline_mode<synchronous>, transform_indices = @transform_5, window_bounds = array<i64: 2, 16, 1>}, {pipeline_mode = #tpu.pipeline_mode<synchronous>, transform_indices = @transform_6, window_bounds = array<i64: 2, 16, 1>}, {pipeline_mode = #tpu.pipeline_mode<synchronous>, transform_indices = @transform_7, window_bounds = array<i64: 2, 8, 16>}, {pipeline_mode = #tpu.pipeline_mode<synchronous>, transform_indices = @transform_8, window_bounds = array<i64: 2, 8, 1>}, {transform_indices = @transform_9, window_bounds = array<i64: 8, 256>}]} {
    %c0 = arith.constant 0 : index
    %c0_0 = arith.constant 0 : index
    %0 = vector.load %arg1[%c0, %c0_0] : memref<8x256xf32, #tpu.memory_space<vmem>>, vector<8x256xf32>
    %c0_1 = arith.constant 0 : index
    %c0_2 = arith.constant 0 : index
    %c0_3 = arith.constant 0 : index
    %1 = vector.load %arg2[%c0_1, %c0_2, %c0_3] : memref<2x16x8xbf16, #tpu.memory_space<vmem>>, vector<1x16x8xbf16>
    %2 = vector.shape_cast %1 : vector<1x16x8xbf16> to vector<16x8xbf16>
    %3 = arith.truncf %0 : vector<8x256xf32> to vector<8x256xbf16>
    %cst = arith.constant dense<0.000000e+00> : vector<16x256xf32>
    %4 = tpu.matmul %2, %3, %cst {dimension_numbers = #tpu.dot_dimension_numbers<[1], [0], [0], [1], [0, 0, 1, 1], [], []>} : vector<16x8xbf16>, vector<8x256xbf16>, vector<16x256xf32> -> vector<16x256xf32>
    %c0_4 = arith.constant 0 : index
    %c0_5 = arith.constant 0 : index
    %c0_6 = arith.constant 0 : index
    %5 = vector.load %arg3[%c0_4, %c0_5, %c0_6] : memref<2x16x1xf32, #tpu.memory_space<vmem>>, vector<1x16x1xf32>
    %6 = vector.shape_cast %5 : vector<1x16x1xf32> to vector<16x1xf32>
    %7 = vector.broadcast %6 : vector<16x1xf32> to vector<16x256xf32>
    %8 = arith.addf %4, %7 : vector<16x256xf32>
    %cst_7 = arith.constant 0.000000e+00 : f32
    %9 = vector.broadcast %cst_7 : f32 to vector<16x256xf32>
    %10 = arith.cmpf ogt, %8, %9 : vector<16x256xf32>
    %c0_8 = arith.constant 0 : index
    %c0_9 = arith.constant 0 : index
    %c0_10 = arith.constant 0 : index
    %11 = vector.load %arg4[%c0_8, %c0_9, %c0_10] : memref<2x16x1xf32, #tpu.memory_space<vmem>>, vector<1x16x1xf32>
    %12 = vector.shape_cast %11 : vector<1x16x1xf32> to vector<16x1xf32>
    %13 = vector.broadcast %12 : vector<16x1xf32> to vector<16x256xf32>
    %14 = arith.mulf %8, %13 : vector<16x256xf32>
    %15 = arith.select %10, %8, %14 : vector<16x256xi1>, vector<16x256xf32>
    %c0_11 = arith.constant 0 : index
    %c4 = arith.constant 4 : index
    %c0_12 = arith.constant 0 : index
    %c0_13 = arith.constant 0 : index
    %16 = vector.load %arg5[%c0_11, %c4, %c0_12, %c0_13] : memref<2x9x16x256xf32, #tpu.memory_space<vmem>>, vector<1x1x16x256xf32>
    %17 = vector.shape_cast %16 : vector<1x1x16x256xf32> to vector<16x256xf32>
    %18 = arith.mulf %15, %17 : vector<16x256xf32>
    %c17_i32 = arith.constant 17 : i32
    %19 = tpu.dynamic_rotate %15 by %c17_i32 dim 1 : vector<16x256xf32>, i32 -> vector<16x256xf32>
    %c0_14 = arith.constant 0 : index
    %c0_15 = arith.constant 0 : index
    %c0_16 = arith.constant 0 : index
    %c0_17 = arith.constant 0 : index
    %20 = vector.load %arg5[%c0_14, %c0_15, %c0_16, %c0_17] : memref<2x9x16x256xf32, #tpu.memory_space<vmem>>, vector<1x1x16x256xf32>
    %21 = vector.shape_cast %20 : vector<1x1x16x256xf32> to vector<16x256xf32>
    %22 = arith.mulf %19, %21 : vector<16x256xf32>
    %23 = arith.addf %18, %22 : vector<16x256xf32>
    %c16_i32 = arith.constant 16 : i32
    %24 = tpu.dynamic_rotate %15 by %c16_i32 dim 1 : vector<16x256xf32>, i32 -> vector<16x256xf32>
    %c0_18 = arith.constant 0 : index
    %c1 = arith.constant 1 : index
    %c0_19 = arith.constant 0 : index
    %c0_20 = arith.constant 0 : index
    %25 = vector.load %arg5[%c0_18, %c1, %c0_19, %c0_20] : memref<2x9x16x256xf32, #tpu.memory_space<vmem>>, vector<1x1x16x256xf32>
    %26 = vector.shape_cast %25 : vector<1x1x16x256xf32> to vector<16x256xf32>
    %27 = arith.mulf %24, %26 : vector<16x256xf32>
    %28 = arith.addf %23, %27 : vector<16x256xf32>
    %c15_i32 = arith.constant 15 : i32
    %29 = tpu.dynamic_rotate %15 by %c15_i32 dim 1 : vector<16x256xf32>, i32 -> vector<16x256xf32>
    %c0_21 = arith.constant 0 : index
    %c2 = arith.constant 2 : index
    %c0_22 = arith.constant 0 : index
    %c0_23 = arith.constant 0 : index
    %30 = vector.load %arg5[%c0_21, %c2, %c0_22, %c0_23] : memref<2x9x16x256xf32, #tpu.memory_space<vmem>>, vector<1x1x16x256xf32>
    %31 = vector.shape_cast %30 : vector<1x1x16x256xf32> to vector<16x256xf32>
    %32 = arith.mulf %29, %31 : vector<16x256xf32>
    %33 = arith.addf %28, %32 : vector<16x256xf32>
    %c1_i32 = arith.constant 1 : i32
    %34 = tpu.dynamic_rotate %15 by %c1_i32 dim 1 : vector<16x256xf32>, i32 -> vector<16x256xf32>
    %c0_24 = arith.constant 0 : index
    %c3 = arith.constant 3 : index
    %c0_25 = arith.constant 0 : index
    %c0_26 = arith.constant 0 : index
    %35 = vector.load %arg5[%c0_24, %c3, %c0_25, %c0_26] : memref<2x9x16x256xf32, #tpu.memory_space<vmem>>, vector<1x1x16x256xf32>
    %36 = vector.shape_cast %35 : vector<1x1x16x256xf32> to vector<16x256xf32>
    %37 = arith.mulf %34, %36 : vector<16x256xf32>
    %38 = arith.addf %33, %37 : vector<16x256xf32>
    %c255_i32 = arith.constant 255 : i32
    %39 = tpu.dynamic_rotate %15 by %c255_i32 dim 1 : vector<16x256xf32>, i32 -> vector<16x256xf32>
    %c0_27 = arith.constant 0 : index
    %c5 = arith.constant 5 : index
    %c0_28 = arith.constant 0 : index
    %c0_29 = arith.constant 0 : index
    %40 = vector.load %arg5[%c0_27, %c5, %c0_28, %c0_29] : memref<2x9x16x256xf32, #tpu.memory_space<vmem>>, vector<1x1x16x256xf32>
    %41 = vector.shape_cast %40 : vector<1x1x16x256xf32> to vector<16x256xf32>
    %42 = arith.mulf %39, %41 : vector<16x256xf32>
    %43 = arith.addf %38, %42 : vector<16x256xf32>
    %c241_i32 = arith.constant 241 : i32
    %44 = tpu.dynamic_rotate %15 by %c241_i32 dim 1 : vector<16x256xf32>, i32 -> vector<16x256xf32>
    %c0_30 = arith.constant 0 : index
    %c6 = arith.constant 6 : index
    %c0_31 = arith.constant 0 : index
    %c0_32 = arith.constant 0 : index
    %45 = vector.load %arg5[%c0_30, %c6, %c0_31, %c0_32] : memref<2x9x16x256xf32, #tpu.memory_space<vmem>>, vector<1x1x16x256xf32>
    %46 = vector.shape_cast %45 : vector<1x1x16x256xf32> to vector<16x256xf32>
    %47 = arith.mulf %44, %46 : vector<16x256xf32>
    %48 = arith.addf %43, %47 : vector<16x256xf32>
    %c240_i32 = arith.constant 240 : i32
    %49 = tpu.dynamic_rotate %15 by %c240_i32 dim 1 : vector<16x256xf32>, i32 -> vector<16x256xf32>
    %c0_33 = arith.constant 0 : index
    %c7 = arith.constant 7 : index
    %c0_34 = arith.constant 0 : index
    %c0_35 = arith.constant 0 : index
    %50 = vector.load %arg5[%c0_33, %c7, %c0_34, %c0_35] : memref<2x9x16x256xf32, #tpu.memory_space<vmem>>, vector<1x1x16x256xf32>
    %51 = vector.shape_cast %50 : vector<1x1x16x256xf32> to vector<16x256xf32>
    %52 = arith.mulf %49, %51 : vector<16x256xf32>
    %53 = arith.addf %48, %52 : vector<16x256xf32>
    %c239_i32 = arith.constant 239 : i32
    %54 = tpu.dynamic_rotate %15 by %c239_i32 dim 1 : vector<16x256xf32>, i32 -> vector<16x256xf32>
    %c0_36 = arith.constant 0 : index
    %c8 = arith.constant 8 : index
    %c0_37 = arith.constant 0 : index
    %c0_38 = arith.constant 0 : index
    %55 = vector.load %arg5[%c0_36, %c8, %c0_37, %c0_38] : memref<2x9x16x256xf32, #tpu.memory_space<vmem>>, vector<1x1x16x256xf32>
    %56 = vector.shape_cast %55 : vector<1x1x16x256xf32> to vector<16x256xf32>
    %57 = arith.mulf %54, %56 : vector<16x256xf32>
    %58 = arith.addf %53, %57 : vector<16x256xf32>
    %c0_39 = arith.constant 0 : index
    %c0_40 = arith.constant 0 : index
    %c0_41 = arith.constant 0 : index
    %59 = vector.load %arg6[%c0_39, %c0_40, %c0_41] : memref<2x16x1xf32, #tpu.memory_space<vmem>>, vector<1x16x1xf32>
    %60 = vector.shape_cast %59 : vector<1x16x1xf32> to vector<16x1xf32>
    %61 = vector.broadcast %60 : vector<16x1xf32> to vector<16x256xf32>
    %62 = arith.addf %58, %61 : vector<16x256xf32>
    %cst_42 = arith.constant 0.000000e+00 : f32
    %63 = vector.broadcast %cst_42 : f32 to vector<16x256xf32>
    %64 = arith.cmpf ogt, %62, %63 : vector<16x256xf32>
    %c0_43 = arith.constant 0 : index
    %c0_44 = arith.constant 0 : index
    %c0_45 = arith.constant 0 : index
    %65 = vector.load %arg7[%c0_43, %c0_44, %c0_45] : memref<2x16x1xf32, #tpu.memory_space<vmem>>, vector<1x16x1xf32>
    %66 = vector.shape_cast %65 : vector<1x16x1xf32> to vector<16x1xf32>
    %67 = vector.broadcast %66 : vector<16x1xf32> to vector<16x256xf32>
    %68 = arith.mulf %62, %67 : vector<16x256xf32>
    %69 = arith.select %64, %62, %68 : vector<16x256xi1>, vector<16x256xf32>
    %c0_46 = arith.constant 0 : index
    %c0_47 = arith.constant 0 : index
    %c0_48 = arith.constant 0 : index
    %70 = vector.load %arg8[%c0_46, %c0_47, %c0_48] : memref<2x8x16xbf16, #tpu.memory_space<vmem>>, vector<1x8x16xbf16>
    %71 = vector.shape_cast %70 : vector<1x8x16xbf16> to vector<8x16xbf16>
    %72 = arith.truncf %69 : vector<16x256xf32> to vector<16x256xbf16>
    %cst_49 = arith.constant dense<0.000000e+00> : vector<8x256xf32>
    %73 = tpu.matmul %71, %72, %cst_49 {dimension_numbers = #tpu.dot_dimension_numbers<[1], [0], [0], [1], [0, 0, 1, 1], [], []>} : vector<8x16xbf16>, vector<16x256xbf16>, vector<8x256xf32> -> vector<8x256xf32>
    %c0_50 = arith.constant 0 : index
    %c0_51 = arith.constant 0 : index
    %c0_52 = arith.constant 0 : index
    %74 = vector.load %arg9[%c0_50, %c0_51, %c0_52] : memref<2x8x1xf32, #tpu.memory_space<vmem>>, vector<1x8x1xf32>
    %75 = vector.shape_cast %74 : vector<1x8x1xf32> to vector<8x1xf32>
    %76 = vector.broadcast %75 : vector<8x1xf32> to vector<8x256xf32>
    %77 = arith.addf %73, %76 : vector<8x256xf32>
    %78 = arith.addf %77, %0 : vector<8x256xf32>
    %c1_53 = arith.constant 1 : index
    %c0_54 = arith.constant 0 : index
    %c0_55 = arith.constant 0 : index
    %79 = vector.load %arg2[%c1_53, %c0_54, %c0_55] : memref<2x16x8xbf16, #tpu.memory_space<vmem>>, vector<1x16x8xbf16>
    %80 = vector.shape_cast %79 : vector<1x16x8xbf16> to vector<16x8xbf16>
    %81 = arith.truncf %78 : vector<8x256xf32> to vector<8x256xbf16>
    %cst_56 = arith.constant dense<0.000000e+00> : vector<16x256xf32>
    %82 = tpu.matmul %80, %81, %cst_56 {dimension_numbers = #tpu.dot_dimension_numbers<[1], [0], [0], [1], [0, 0, 1, 1], [], []>} : vector<16x8xbf16>, vector<8x256xbf16>, vector<16x256xf32> -> vector<16x256xf32>
    %c1_57 = arith.constant 1 : index
    %c0_58 = arith.constant 0 : index
    %c0_59 = arith.constant 0 : index
    %83 = vector.load %arg3[%c1_57, %c0_58, %c0_59] : memref<2x16x1xf32, #tpu.memory_space<vmem>>, vector<1x16x1xf32>
    %84 = vector.shape_cast %83 : vector<1x16x1xf32> to vector<16x1xf32>
    %85 = vector.broadcast %84 : vector<16x1xf32> to vector<16x256xf32>
    %86 = arith.addf %82, %85 : vector<16x256xf32>
    %cst_60 = arith.constant 0.000000e+00 : f32
    %87 = vector.broadcast %cst_60 : f32 to vector<16x256xf32>
    %88 = arith.cmpf ogt, %86, %87 : vector<16x256xf32>
    %c1_61 = arith.constant 1 : index
    %c0_62 = arith.constant 0 : index
    %c0_63 = arith.constant 0 : index
    %89 = vector.load %arg4[%c1_61, %c0_62, %c0_63] : memref<2x16x1xf32, #tpu.memory_space<vmem>>, vector<1x16x1xf32>
    %90 = vector.shape_cast %89 : vector<1x16x1xf32> to vector<16x1xf32>
    %91 = vector.broadcast %90 : vector<16x1xf32> to vector<16x256xf32>
    %92 = arith.mulf %86, %91 : vector<16x256xf32>
    %93 = arith.select %88, %86, %92 : vector<16x256xi1>, vector<16x256xf32>
    %c1_64 = arith.constant 1 : index
    %c4_65 = arith.constant 4 : index
    %c0_66 = arith.constant 0 : index
    %c0_67 = arith.constant 0 : index
    %94 = vector.load %arg5[%c1_64, %c4_65, %c0_66, %c0_67] : memref<2x9x16x256xf32, #tpu.memory_space<vmem>>, vector<1x1x16x256xf32>
    %95 = vector.shape_cast %94 : vector<1x1x16x256xf32> to vector<16x256xf32>
    %96 = arith.mulf %93, %95 : vector<16x256xf32>
    %c17_i32_68 = arith.constant 17 : i32
    %97 = tpu.dynamic_rotate %93 by %c17_i32_68 dim 1 : vector<16x256xf32>, i32 -> vector<16x256xf32>
    %c1_69 = arith.constant 1 : index
    %c0_70 = arith.constant 0 : index
    %c0_71 = arith.constant 0 : index
    %c0_72 = arith.constant 0 : index
    %98 = vector.load %arg5[%c1_69, %c0_70, %c0_71, %c0_72] : memref<2x9x16x256xf32, #tpu.memory_space<vmem>>, vector<1x1x16x256xf32>
    %99 = vector.shape_cast %98 : vector<1x1x16x256xf32> to vector<16x256xf32>
    %100 = arith.mulf %97, %99 : vector<16x256xf32>
    %101 = arith.addf %96, %100 : vector<16x256xf32>
    %c16_i32_73 = arith.constant 16 : i32
    %102 = tpu.dynamic_rotate %93 by %c16_i32_73 dim 1 : vector<16x256xf32>, i32 -> vector<16x256xf32>
    %c1_74 = arith.constant 1 : index
    %c1_75 = arith.constant 1 : index
    %c0_76 = arith.constant 0 : index
    %c0_77 = arith.constant 0 : index
    %103 = vector.load %arg5[%c1_74, %c1_75, %c0_76, %c0_77] : memref<2x9x16x256xf32, #tpu.memory_space<vmem>>, vector<1x1x16x256xf32>
    %104 = vector.shape_cast %103 : vector<1x1x16x256xf32> to vector<16x256xf32>
    %105 = arith.mulf %102, %104 : vector<16x256xf32>
    %106 = arith.addf %101, %105 : vector<16x256xf32>
    %c15_i32_78 = arith.constant 15 : i32
    %107 = tpu.dynamic_rotate %93 by %c15_i32_78 dim 1 : vector<16x256xf32>, i32 -> vector<16x256xf32>
    %c1_79 = arith.constant 1 : index
    %c2_80 = arith.constant 2 : index
    %c0_81 = arith.constant 0 : index
    %c0_82 = arith.constant 0 : index
    %108 = vector.load %arg5[%c1_79, %c2_80, %c0_81, %c0_82] : memref<2x9x16x256xf32, #tpu.memory_space<vmem>>, vector<1x1x16x256xf32>
    %109 = vector.shape_cast %108 : vector<1x1x16x256xf32> to vector<16x256xf32>
    %110 = arith.mulf %107, %109 : vector<16x256xf32>
    %111 = arith.addf %106, %110 : vector<16x256xf32>
    %c1_i32_83 = arith.constant 1 : i32
    %112 = tpu.dynamic_rotate %93 by %c1_i32_83 dim 1 : vector<16x256xf32>, i32 -> vector<16x256xf32>
    %c1_84 = arith.constant 1 : index
    %c3_85 = arith.constant 3 : index
    %c0_86 = arith.constant 0 : index
    %c0_87 = arith.constant 0 : index
    %113 = vector.load %arg5[%c1_84, %c3_85, %c0_86, %c0_87] : memref<2x9x16x256xf32, #tpu.memory_space<vmem>>, vector<1x1x16x256xf32>
    %114 = vector.shape_cast %113 : vector<1x1x16x256xf32> to vector<16x256xf32>
    %115 = arith.mulf %112, %114 : vector<16x256xf32>
    %116 = arith.addf %111, %115 : vector<16x256xf32>
    %c255_i32_88 = arith.constant 255 : i32
    %117 = tpu.dynamic_rotate %93 by %c255_i32_88 dim 1 : vector<16x256xf32>, i32 -> vector<16x256xf32>
    %c1_89 = arith.constant 1 : index
    %c5_90 = arith.constant 5 : index
    %c0_91 = arith.constant 0 : index
    %c0_92 = arith.constant 0 : index
    %118 = vector.load %arg5[%c1_89, %c5_90, %c0_91, %c0_92] : memref<2x9x16x256xf32, #tpu.memory_space<vmem>>, vector<1x1x16x256xf32>
    %119 = vector.shape_cast %118 : vector<1x1x16x256xf32> to vector<16x256xf32>
    %120 = arith.mulf %117, %119 : vector<16x256xf32>
    %121 = arith.addf %116, %120 : vector<16x256xf32>
    %c241_i32_93 = arith.constant 241 : i32
    %122 = tpu.dynamic_rotate %93 by %c241_i32_93 dim 1 : vector<16x256xf32>, i32 -> vector<16x256xf32>
    %c1_94 = arith.constant 1 : index
    %c6_95 = arith.constant 6 : index
    %c0_96 = arith.constant 0 : index
    %c0_97 = arith.constant 0 : index
    %123 = vector.load %arg5[%c1_94, %c6_95, %c0_96, %c0_97] : memref<2x9x16x256xf32, #tpu.memory_space<vmem>>, vector<1x1x16x256xf32>
    %124 = vector.shape_cast %123 : vector<1x1x16x256xf32> to vector<16x256xf32>
    %125 = arith.mulf %122, %124 : vector<16x256xf32>
    %126 = arith.addf %121, %125 : vector<16x256xf32>
    %c240_i32_98 = arith.constant 240 : i32
    %127 = tpu.dynamic_rotate %93 by %c240_i32_98 dim 1 : vector<16x256xf32>, i32 -> vector<16x256xf32>
    %c1_99 = arith.constant 1 : index
    %c7_100 = arith.constant 7 : index
    %c0_101 = arith.constant 0 : index
    %c0_102 = arith.constant 0 : index
    %128 = vector.load %arg5[%c1_99, %c7_100, %c0_101, %c0_102] : memref<2x9x16x256xf32, #tpu.memory_space<vmem>>, vector<1x1x16x256xf32>
    %129 = vector.shape_cast %128 : vector<1x1x16x256xf32> to vector<16x256xf32>
    %130 = arith.mulf %127, %129 : vector<16x256xf32>
    %131 = arith.addf %126, %130 : vector<16x256xf32>
    %c239_i32_103 = arith.constant 239 : i32
    %132 = tpu.dynamic_rotate %93 by %c239_i32_103 dim 1 : vector<16x256xf32>, i32 -> vector<16x256xf32>
    %c1_104 = arith.constant 1 : index
    %c8_105 = arith.constant 8 : index
    %c0_106 = arith.constant 0 : index
    %c0_107 = arith.constant 0 : index
    %133 = vector.load %arg5[%c1_104, %c8_105, %c0_106, %c0_107] : memref<2x9x16x256xf32, #tpu.memory_space<vmem>>, vector<1x1x16x256xf32>
    %134 = vector.shape_cast %133 : vector<1x1x16x256xf32> to vector<16x256xf32>
    %135 = arith.mulf %132, %134 : vector<16x256xf32>
    %136 = arith.addf %131, %135 : vector<16x256xf32>
    %c1_108 = arith.constant 1 : index
    %c0_109 = arith.constant 0 : index
    %c0_110 = arith.constant 0 : index
    %137 = vector.load %arg6[%c1_108, %c0_109, %c0_110] : memref<2x16x1xf32, #tpu.memory_space<vmem>>, vector<1x16x1xf32>
    %138 = vector.shape_cast %137 : vector<1x16x1xf32> to vector<16x1xf32>
    %139 = vector.broadcast %138 : vector<16x1xf32> to vector<16x256xf32>
    %140 = arith.addf %136, %139 : vector<16x256xf32>
    %cst_111 = arith.constant 0.000000e+00 : f32
    %141 = vector.broadcast %cst_111 : f32 to vector<16x256xf32>
    %142 = arith.cmpf ogt, %140, %141 : vector<16x256xf32>
    %c1_112 = arith.constant 1 : index
    %c0_113 = arith.constant 0 : index
    %c0_114 = arith.constant 0 : index
    %143 = vector.load %arg7[%c1_112, %c0_113, %c0_114] : memref<2x16x1xf32, #tpu.memory_space<vmem>>, vector<1x16x1xf32>
    %144 = vector.shape_cast %143 : vector<1x16x1xf32> to vector<16x1xf32>
    %145 = vector.broadcast %144 : vector<16x1xf32> to vector<16x256xf32>
    %146 = arith.mulf %140, %145 : vector<16x256xf32>
    %147 = arith.select %142, %140, %146 : vector<16x256xi1>, vector<16x256xf32>
    %c1_115 = arith.constant 1 : index
    %c0_116 = arith.constant 0 : index
    %c0_117 = arith.constant 0 : index
    %148 = vector.load %arg8[%c1_115, %c0_116, %c0_117] : memref<2x8x16xbf16, #tpu.memory_space<vmem>>, vector<1x8x16xbf16>
    %149 = vector.shape_cast %148 : vector<1x8x16xbf16> to vector<8x16xbf16>
    %150 = arith.truncf %147 : vector<16x256xf32> to vector<16x256xbf16>
    %cst_118 = arith.constant dense<0.000000e+00> : vector<8x256xf32>
    %151 = tpu.matmul %149, %150, %cst_118 {dimension_numbers = #tpu.dot_dimension_numbers<[1], [0], [0], [1], [0, 0, 1, 1], [], []>} : vector<8x16xbf16>, vector<16x256xbf16>, vector<8x256xf32> -> vector<8x256xf32>
    %c1_119 = arith.constant 1 : index
    %c0_120 = arith.constant 0 : index
    %c0_121 = arith.constant 0 : index
    %152 = vector.load %arg9[%c1_119, %c0_120, %c0_121] : memref<2x8x1xf32, #tpu.memory_space<vmem>>, vector<1x8x1xf32>
    %153 = vector.shape_cast %152 : vector<1x8x1xf32> to vector<8x1xf32>
    %154 = vector.broadcast %153 : vector<8x1xf32> to vector<8x256xf32>
    %155 = arith.addf %151, %154 : vector<8x256xf32>
    %156 = arith.addf %155, %78 : vector<8x256xf32>
    %c0_122 = arith.constant 0 : index
    %c0_123 = arith.constant 0 : index
    %157 = vector.load %arg10[%c0_122, %c0_123] : memref<8x256xf32, #tpu.memory_space<vmem>>, vector<8x256xf32>
    tpu.vector_store %arg10[%c0_122, %c0_123], %156 {strides = array<i32>} : memref<8x256xf32, #tpu.memory_space<vmem>>, vector<8x256xf32>,
    return
  }
  func.func @transform_0(%arg0: i32) -> (i32, i32) {
    %c0_i32 = arith.constant 0 : i32
    %c0_i32_0 = arith.constant 0 : i32
    return %c0_i32, %arg0 : i32, i32
  }
  func.func @transform_1(%arg0: i32) -> (i32, i32, i32) {
    %c0_i32 = arith.constant 0 : i32
    %c0_i32_0 = arith.constant 0 : i32
    %c0_i32_1 = arith.constant 0 : i32
    %c0_i32_2 = arith.constant 0 : i32
    return %c0_i32, %c0_i32_0, %c0_i32_1 : i32, i32, i32
  }
  func.func @transform_2(%arg0: i32) -> (i32, i32, i32) {
    %c0_i32 = arith.constant 0 : i32
    %c0_i32_0 = arith.constant 0 : i32
    %c0_i32_1 = arith.constant 0 : i32
    %c0_i32_2 = arith.constant 0 : i32
    return %c0_i32, %c0_i32_0, %c0_i32_1 : i32, i32, i32
  }
  func.func @transform_3(%arg0: i32) -> (i32, i32, i32) {
    %c0_i32 = arith.constant 0 : i32
    %c0_i32_0 = arith.constant 0 : i32
    %c0_i32_1 = arith.constant 0 : i32
    %c0_i32_2 = arith.constant 0 : i32
    return %c0_i32, %c0_i32_0, %c0_i32_1 : i32, i32, i32
  }
  func.func @transform_4(%arg0: i32) -> (i32, i32, i32, i32) {
    %c0_i32 = arith.constant 0 : i32
    %c0_i32_0 = arith.constant 0 : i32
    %c0_i32_1 = arith.constant 0 : i32
    %c0_i32_2 = arith.constant 0 : i32
    %c0_i32_3 = arith.constant 0 : i32
    return %c0_i32, %c0_i32_0, %c0_i32_1, %c0_i32_2 : i32, i32, i32, i32
  }
  func.func @transform_5(%arg0: i32) -> (i32, i32, i32) {
    %c0_i32 = arith.constant 0 : i32
    %c0_i32_0 = arith.constant 0 : i32
    %c0_i32_1 = arith.constant 0 : i32
    %c0_i32_2 = arith.constant 0 : i32
    return %c0_i32, %c0_i32_0, %c0_i32_1 : i32, i32, i32
  }
  func.func @transform_6(%arg0: i32) -> (i32, i32, i32) {
    %c0_i32 = arith.constant 0 : i32
    %c0_i32_0 = arith.constant 0 : i32
    %c0_i32_1 = arith.constant 0 : i32
    %c0_i32_2 = arith.constant 0 : i32
    return %c0_i32, %c0_i32_0, %c0_i32_1 : i32, i32, i32
  }
  func.func @transform_7(%arg0: i32) -> (i32, i32, i32) {
    %c0_i32 = arith.constant 0 : i32
    %c0_i32_0 = arith.constant 0 : i32
    %c0_i32_1 = arith.constant 0 : i32
    %c0_i32_2 = arith.constant 0 : i32
    return %c0_i32, %c0_i32_0, %c0_i32_1 : i32, i32, i32
  }
  func.func @transform_8(%arg0: i32) -> (i32, i32, i32) {
    %c0_i32 = arith.constant 0 : i32
    %c0_i32_0 = arith.constant 0 : i32
    %c0_i32_1 = arith.constant 0 : i32
    %c0_i32_2 = arith.constant 0 : i32
    return %c0_i32, %c0_i32_0, %c0_i32_1 : i32, i32, i32
  }
  func.func @transform_9(%arg0: i32) -> (i32, i32) {
    %c0_i32 = arith.constant 0 : i32
    %c0_i32_0 = arith.constant 0 : i32
    return %c0_i32, %arg0 : i32, i32
  }
}

</mosaic_0001>

<llo_original>
// kernel: residual_forward_nchw.1
$region0: #{residual_forward_nchw.1}
  #allocation0 [shape = 'u32[]', space=smem, size = 0x4, offset = 0x4, fixed_abs, tag = 'smem constant byte address 0x4 - core index']
  #allocation1 [shape = 'u32[144,128]{1,0:T(1,128)}', space=vmem, size = 0x12000, scoped, tag = 'internal scratch']
  %s0 = inlined_call_operand.vmem [shape: f32[8,512], index: 0, kind: input, shape index: {}, may-alias: {0,9}]
  %s1 = inlined_call_operand.vmem [shape: bf16[2,16,8], index: 1, kind: input, shape index: {}]
  %s2 = inlined_call_operand.vmem [shape: f32[2,16,1], index: 2, kind: input, shape index: {}]
  %s3 = inlined_call_operand.vmem [shape: f32[2,16,1], index: 3, kind: input, shape index: {}]
  %s4 = inlined_call_operand.hbm [shape: f32[2,9,16,256], index: 4, kind: input, shape index: {}]
  %s5 = inlined_call_operand.vmem [shape: f32[2,16,1], index: 5, kind: input, shape index: {}]
  %s6 = inlined_call_operand.vmem [shape: f32[2,16,1], index: 6, kind: input, shape index: {}]
  %s7 = inlined_call_operand.vmem [shape: bf16[2,8,16], index: 7, kind: input, shape index: {}]
  %s8 = inlined_call_operand.vmem [shape: f32[2,8,1], index: 8, kind: input, shape index: {}]
  %s9 = inlined_call_operand.vmem [shape: f32[8,512], index: 9, kind: output, shape index: {}, may-alias: {0,9}]
  %s10 = sld [smem:[#allocation0]]
  $region73: #{residual_forward_nchw.1} parent=0
    _
  %s12 = ssub.s32 1, %s10
  %s13 = scalar_select 0, %s12, %s10
  $region1: #{residual_forward_nchw.1} parent=0
    #allocation2 [shape = 'u8[294912]{0}', space=vmem, size = 0x48000, scoped, tag = 'input window, operand 4, single buffered']
    #allocation3 [shape = 's32[2]{0}', space=sflag, size = 0x8, scoped, tag = 'scoped memory for residual_forward_nchw.1']
    %14 = vsyncpa [#allocation3], 0
    loop: start=0, step=1, limit=4
    $region2: #{residual_forward_nchw.1} parent=1 // loop_pre_header
      _
    $region3: #{residual_forward_nchw.1} parent=1 // loop_header
      %s16 = sphi 0, %s20
      %p17 = scmp.ge.s32.totalorder %s16, 4
      %s26 = sphi 0, %s28
      %s29 = sphi 0, %s26
      %s30 = sphi 0, %s29
      %s46 = sphi 0, %s30
      %s50 = sphi 0, %s50
      %s52 = sphi 0, %s50
      %s53 = sphi 0, %s52
      %s67 = sphi 0, %s53
      %s71 = sphi 0, %s71
      %s73 = sphi 0, %s71
      %s74 = sphi 0, %s73
      %s88 = sphi 0, %s74
      %s92 = sphi 0, %s92
      %s94 = sphi 0, %s92
      %s95 = sphi 0, %s94
      %s109 = sphi 0, %s95
      %s113 = sphi 0, %s113
      %s115 = sphi 0, %s113
      %s116 = sphi 0, %s115
      %s130 = sphi 0, %s116
      %s134 = sphi 0, %s134
      %s136 = sphi 0, %s134
      %s137 = sphi 0, %s136
      %s151 = sphi 0, %s137
      %s155 = sphi 0, %s155
      %s157 = sphi 0, %s155
      %s158 = sphi 0, %s157
      %s172 = sphi 0, %s158
      %s176 = sphi 0, %s176
      %s178 = sphi 0, %s176
      %s179 = sphi 0, %s178
      %s193 = sphi 0, %s179
      %s197 = sphi 0, %s197
      %s199 = sphi 0, %s197
      %s200 = sphi 0, %s199
      %s214 = sphi 0, %s200
      %s220 = sphi 0, %s222
      %s223 = sphi 0, %s220
      %s224 = sphi 0, %s223
      %s240 = sphi 0, %s224
    $region4: #{residual_forward_nchw.1} parent=1 // loop_header_branch
      %19 = sbr.rel (%p17) target = $region8
    $region5: #{residual_forward_nchw.1} parent=1 // loop_body
      %s21 = ssub.s32 %s16, 1
      %s22 = ssub.s32 %s16, 2
      %s23 = sadd.s32 %s16, 1
      %s24 = ssub.s32 %s16, %s23
      %p25 = scmp.eq.s32.totalorder %s24, 0
      %s27 = sadd.s32 %s26, 1
      %s28 = scalar_select %p25, %s26, %s27
      %p31 = pneg %p25
      %p32 = scmp.eq.s32.totalorder %s16, 1
      %p33 = por %p31, %p32
      %p34 = scmp.ne.s32.totalorder %s26, %s29
      %p35 = scmp.eq.s32.totalorder %s16, 0
      %p36 = por %p34, %p35
      %p37 = scmp.ne.s32.totalorder %s26, %s29
      %p38 = scmp.eq.s32.totalorder %s21, 1
      %p39 = por %p37, %p38
      %p40 = scmp.ne.s32.totalorder %s29, %s30
      %p41 = scmp.eq.s32.totalorder %s21, 0
      %p42 = por %p40, %p41
      %p43 = scmp.ne.s32.totalorder %s29, %s30
      %p44 = scmp.eq.s32.totalorder %s22, 1
      %p45 = por %p43, %p44
      %p47 = scmp.ne.s32.totalorder %s30, %s46
      %p48 = scmp.eq.s32.totalorder %s22, 0
      %p49 = por %p47, %p48
      %s51 = sadd.s32 %s50, 1
      %p54 = scmp.eq.s32.totalorder %s16, 1
      %p55 = scmp.ne.s32.totalorder %s50, %s52
      %p56 = scmp.eq.s32.totalorder %s16, 0
      %p57 = por %p55, %p56
      %p58 = scmp.ne.s32.totalorder %s50, %s52
      %p59 = scmp.eq.s32.totalorder %s21, 1
      %p60 = por %p58, %p59
      %p61 = scmp.ne.s32.totalorder %s52, %s53
      %p62 = scmp.eq.s32.totalorder %s21, 0
      %p63 = por %p61, %p62
      %p64 = scmp.ne.s32.totalorder %s52, %s53
      %p65 = scmp.eq.s32.totalorder %s22, 1
      %p66 = por %p64, %p65
      %p68 = scmp.ne.s32.totalorder %s53, %s67
      %p69 = scmp.eq.s32.totalorder %s22, 0
      %p70 = por %p68, %p69
      %s72 = sadd.s32 %s71, 1
      %p75 = scmp.eq.s32.totalorder %s16, 1
      %p76 = scmp.ne.s32.totalorder %s71, %s73
      %p77 = scmp.eq.s32.totalorder %s16, 0
      %p78 = por %p76, %p77
      %p79 = scmp.ne.s32.totalorder %s71, %s73
      %p80 = scmp.eq.s32.totalorder %s21, 1
      %p81 = por %p79, %p80
      %p82 = scmp.ne.s32.totalorder %s73, %s74
      %p83 = scmp.eq.s32.totalorder %s21, 0
      %p84 = por %p82, %p83
      %p85 = scmp.ne.s32.totalorder %s73, %s74
      %p86 = scmp.eq.s32.totalorder %s22, 1
      %p87 = por %p85, %p86
      %p89 = scmp.ne.s32.totalorder %s74, %s88
      %p90 = scmp.eq.s32.totalorder %s22, 0
      %p91 = por %p89, %p90
      %s93 = sadd.s32 %s92, 1
      %p96 = scmp.eq.s32.totalorder %s16, 1
      %p97 = scmp.ne.s32.totalorder %s92, %s94
      %p98 = scmp.eq.s32.totalorder %s16, 0
      %p99 = por %p97, %p98
      %p100 = scmp.ne.s32.totalorder %s92, %s94
      %p101 = scmp.eq.s32.totalorder %s21, 1
      %p102 = por %p100, %p101
      %p103 = scmp.ne.s32.totalorder %s94, %s95
      %p104 = scmp.eq.s32.totalorder %s21, 0
      %p105 = por %p103, %p104
      %p106 = scmp.ne.s32.totalorder %s94, %s95
      %p107 = scmp.eq.s32.totalorder %s22, 1
      %p108 = por %p106, %p107
      %p110 = scmp.ne.s32.totalorder %s95, %s109
      %p111 = scmp.eq.s32.totalorder %s22, 0
      %p112 = por %p110, %p111
      %s114 = sadd.s32 %s113, 1
      %p117 = scmp.eq.s32.totalorder %s16, 1
      %p118 = scmp.ne.s32.totalorder %s113, %s115
      %p119 = scmp.eq.s32.totalorder %s16, 0
      %p120 = por %p118, %p119
      %p121 = scmp.ne.s32.totalorder %s113, %s115
      %p122 = scmp.eq.s32.totalorder %s21, 1
      %p123 = por %p121, %p122
      %p124 = scmp.ne.s32.totalorder %s115, %s116
      %p125 = scmp.eq.s32.totalorder %s21, 0
      %p126 = por %p124, %p125
      %p127 = scmp.ne.s32.totalorder %s115, %s116
      %p128 = scmp.eq.s32.totalorder %s22, 1
      %p129 = por %p127, %p128
      %p131 = scmp.ne.s32.totalorder %s116, %s130
      %p132 = scmp.eq.s32.totalorder %s22, 0
      %p133 = por %p131, %p132
      %s135 = sadd.s32 %s134, 1
      %p138 = scmp.eq.s32.totalorder %s16, 1
      %p139 = scmp.ne.s32.totalorder %s134, %s136
      %p140 = scmp.eq.s32.totalorder %s16, 0
      %p141 = por %p139, %p140
      %p142 = scmp.ne.s32.totalorder %s134, %s136
      %p143 = scmp.eq.s32.totalorder %s21, 1
      %p144 = por %p142, %p143
      %p145 = scmp.ne.s32.totalorder %s136, %s137
      %p146 = scmp.eq.s32.totalorder %s21, 0
      %p147 = por %p145, %p146
      %p148 = scmp.ne.s32.totalorder %s136, %s137
      %p149 = scmp.eq.s32.totalorder %s22, 1
      %p150 = por %p148, %p149
      %p152 = scmp.ne.s32.totalorder %s137, %s151
      %p153 = scmp.eq.s32.totalorder %s22, 0
      %p154 = por %p152, %p153
      %s156 = sadd.s32 %s155, 1
      %p159 = scmp.eq.s32.totalorder %s16, 1
      %p160 = scmp.ne.s32.totalorder %s155, %s157
      %p161 = scmp.eq.s32.totalorder %s16, 0
      %p162 = por %p160, %p161
      %p163 = scmp.ne.s32.totalorder %s155, %s157
      %p164 = scmp.eq.s32.totalorder %s21, 1
      %p165 = por %p163, %p164
      %p166 = scmp.ne.s32.totalorder %s157, %s158
      %p167 = scmp.eq.s32.totalorder %s21, 0
      %p168 = por %p166, %p167
      %p169 = scmp.ne.s32.totalorder %s157, %s158
      %p170 = scmp.eq.s32.totalorder %s22, 1
      %p171 = por %p169, %p170
      %p173 = scmp.ne.s32.totalorder %s158, %s172
      %p174 = scmp.eq.s32.totalorder %s22, 0
      %p175 = por %p173, %p174
      %s177 = sadd.s32 %s176, 1
      %p180 = scmp.eq.s32.totalorder %s16, 1
      %p181 = scmp.ne.s32.totalorder %s176, %s178
      %p182 = scmp.eq.s32.totalorder %s16, 0
      %p183 = por %p181, %p182
      %p184 = scmp.ne.s32.totalorder %s176, %s178
      %p185 = scmp.eq.s32.totalorder %s21, 1
      %p186 = por %p184, %p185
      %p187 = scmp.ne.s32.totalorder %s178, %s179
      %p188 = scmp.eq.s32.totalorder %s21, 0
      %p189 = por %p187, %p188
      %p190 = scmp.ne.s32.totalorder %s178, %s179
      %p191 = scmp.eq.s32.totalorder %s22, 1
      %p192 = por %p190, %p191
      %p194 = scmp.ne.s32.totalorder %s179, %s193
      %p195 = scmp.eq.s32.totalorder %s22, 0
      %p196 = por %p194, %p195
      %s198 = sadd.s32 %s197, 1
      %p201 = scmp.eq.s32.totalorder %s16, 1
      %p202 = scmp.ne.s32.totalorder %s197, %s199
      %p203 = scmp.eq.s32.totalorder %s16, 0
      %p204 = por %p202, %p203
      %p205 = scmp.ne.s32.totalorder %s197, %s199
      %p206 = scmp.eq.s32.totalorder %s21, 1
      %p207 = por %p205, %p206
      %p208 = scmp.ne.s32.totalorder %s199, %s200
      %p209 = scmp.eq.s32.totalorder %s21, 0
      %p210 = por %p208, %p209
      %p211 = scmp.ne.s32.totalorder %s199, %s200
      %p212 = scmp.eq.s32.totalorder %s22, 1
      %p213 = por %p211, %p212
      %p215 = scmp.ne.s32.totalorder %s200, %s214
      %p216 = scmp.eq.s32.totalorder %s22, 0
      %p217 = por %p215, %p216
      %s218 = ssub.s32 %s16, %s23
      %p219 = scmp.eq.s32.totalorder %s218, 0
      %s221 = sadd.s32 %s220, 1
      %s222 = scalar_select %p219, %s220, %s221
      %p225 = pneg %p219
      %p226 = scmp.eq.s32.totalorder %s16, 1
      %p227 = por %p225, %p226
      %p228 = scmp.ne.s32.totalorder %s220, %s223
      %p229 = scmp.eq.s32.totalorder %s16, 0
      %p230 = por %p228, %p229
      %p231 = scmp.ne.s32.totalorder %s220, %s223
      %p232 = scmp.eq.s32.totalorder %s21, 1
      %p233 = por %p231, %p232
      %p234 = scmp.ne.s32.totalorder %s223, %s224
      %p235 = scmp.eq.s32.totalorder %s21, 0
      %p236 = por %p234, %p235
      %p237 = scmp.ne.s32.totalorder %s223, %s224
      %p238 = scmp.eq.s32.totalorder %s22, 1
      %p239 = por %p237, %p238
      %p241 = scmp.ne.s32.totalorder %s224, %s240
      %p242 = scmp.eq.s32.totalorder %s22, 0
      %p243 = por %p241, %p242
      %p244 = scmp.le.s32.totalorder 1, %s16
      %p245 = scmp.lt.s32.totalorder %s16, 3
      %p246 = pnand %p244, %p245
      %p247 = pneg %p246
      // Predicated region
      $region9: #{residual_forward_nchw.1} parent=5 // pred_check
        _
      $region10: #{residual_forward_nchw.1} parent=5 // pred_check_branch
        %249 = sbr.rel (%p246) target = $region12
      $region11: #{residual_forward_nchw.1} parent=5 // pred_region
        %s250 = ssub.s32 %s16, 1
        // Predicated region
        $region13: #{residual_forward_nchw.1} parent=11 // pred_check
          %p251 = pneg %p63
        $region14: #{residual_forward_nchw.1} parent=11 // pred_check_branch
          %253 = sbr.rel (%p251) target = $region16
        $region15: #{residual_forward_nchw.1} parent=11 // pred_region
          _
        $region16: #{residual_forward_nchw.1} parent=11 // pred_fallthru
          _
        // Predicated region
        $region17: #{residual_forward_nchw.1} parent=11 // pred_check
          %p254 = pneg %p84
        $region18: #{residual_forward_nchw.1} parent=11 // pred_check_branch
          %256 = sbr.rel (%p254) target = $region20
        $region19: #{residual_forward_nchw.1} parent=11 // pred_region
          _
        $region20: #{residual_forward_nchw.1} parent=11 // pred_fallthru
          _
        // Predicated region
        $region21: #{residual_forward_nchw.1} parent=11 // pred_check
          %p257 = pneg %p105
        $region22: #{residual_forward_nchw.1} parent=11 // pred_check_branch
          %259 = sbr.rel (%p257) target = $region24
        $region23: #{residual_forward_nchw.1} parent=11 // pred_region
          _
        $region24: #{residual_forward_nchw.1} parent=11 // pred_fallthru
          _
        // Predicated region
        $region25: #{residual_forward_nchw.1} parent=11 // pred_check
          %p260 = pneg %p126
        $region26: #{residual_forward_nchw.1} parent=11 // pred_check_branch
          %262 = sbr.rel (%p260) target = $region28
        $region27: #{residual_forward_nchw.1} parent=11 // pred_region
          %s264 = ssub.s32 9216, 9216
          %265 = vsyncadd [#allocation3], %s264
          %s266 = sshll.u32 [#allocation2], 4
          %s267 = int_to_ptr.vmem [resolvable:$true] %s266
          %272 = dma.hbm_to_vmem [thread:$0]  %s4, 9216, %s267, [#allocation3], 256, 256, 16
        $region28: #{residual_forward_nchw.1} parent=11 // pred_fallthru
          _
        // Predicated region
        $region29: #{residual_forward_nchw.1} parent=11 // pred_check
          %p273 = pneg %p147
        $region30: #{residual_forward_nchw.1} parent=11 // pred_check_branch
          %275 = sbr.rel (%p273) target = $region32
        $region31: #{residual_forward_nchw.1} parent=11 // pred_region
          _
        $region32: #{residual_forward_nchw.1} parent=11 // pred_fallthru
          _
        // Predicated region
        $region33: #{residual_forward_nchw.1} parent=11 // pred_check
          %p276 = pneg %p168
        $region34: #{residual_forward_nchw.1} parent=11 // pred_check_branch
          %278 = sbr.rel (%p276) target = $region36
        $region35: #{residual_forward_nchw.1} parent=11 // pred_region
          _
        $region36: #{residual_forward_nchw.1} parent=11 // pred_fallthru
          _
        // Predicated region
        $region37: #{residual_forward_nchw.1} parent=11 // pred_check
          %p279 = pneg %p189
        $region38: #{residual_forward_nchw.1} parent=11 // pred_check_branch
          %281 = sbr.rel (%p279) target = $region40
        $region39: #{residual_forward_nchw.1} parent=11 // pred_region
          _
        $region40: #{residual_forward_nchw.1} parent=11 // pred_fallthru
          _
        // Predicated region
        $region41: #{residual_forward_nchw.1} parent=11 // pred_check
          %p282 = pneg %p210
        $region42: #{residual_forward_nchw.1} parent=11 // pred_check_branch
          %284 = sbr.rel (%p282) target = $region44
        $region43: #{residual_forward_nchw.1} parent=11 // pred_region
          _
        $region44: #{residual_forward_nchw.1} parent=11 // pred_fallthru
          _
      $region12: #{residual_forward_nchw.1} parent=5 // pred_fallthru
        _
      %p285 = scmp.lt.s32.totalorder %s16, 2
      // Predicated region
      $region45: #{residual_forward_nchw.1} parent=5 // pred_check
        %p286 = pneg %p285
      $region46: #{residual_forward_nchw.1} parent=5 // pred_check_branch
        %288 = sbr.rel (%p286) target = $region48
      $region47: #{residual_forward_nchw.1} parent=5 // pred_region
        // Predicated region
        $region49: #{residual_forward_nchw.1} parent=47 // pred_check
          %p289 = pneg %p36
        $region50: #{residual_forward_nchw.1} parent=47 // pred_check_branch
          %291 = sbr.rel (%p289) target = $region52
        $region51: #{residual_forward_nchw.1} parent=47 // pred_region
          %s292 = smul.u32 2, %s16
          %p293 = scmp.lt.s32.totalorder %s292, 3
          %s294 = scalar_select %p293, %s292, 3
          %s295 = smul.addr %s294, 8
          %s296 = scalar_lea.vmem %s0, %s295
          %s297 = smul.u32 2, %s16
        $region52: #{residual_forward_nchw.1} parent=47 // pred_fallthru
          _
      $region48: #{residual_forward_nchw.1} parent=5 // pred_fallthru
        _
      %p298 = scmp.le.s32.totalorder 1, %s16
      %p299 = scmp.lt.s32.totalorder %s16, 3
      %p300 = pnand %p298, %p299
      %p301 = pneg %p300
      // Predicated region
      $region53: #{residual_forward_nchw.1} parent=5 // pred_check
        _
      $region54: #{residual_forward_nchw.1} parent=5 // pred_check_branch
        %303 = sbr.rel (%p300) target = $region56
      $region55: #{residual_forward_nchw.1} parent=5 // pred_region
        %s304 = ssub.s32 %s16, 1
        // Predicated region
        $region57: #{residual_forward_nchw.1} parent=55 // pred_check
          %p305 = pneg %p126
        $region58: #{residual_forward_nchw.1} parent=55 // pred_check_branch
          %307 = sbr.rel (%p305) target = $region60
        $region59: #{residual_forward_nchw.1} parent=55 // pred_region
          %308 = dma.done [#allocation3], 9216
        $region60: #{residual_forward_nchw.1} parent=55 // pred_fallthru
          _
        %s309 = smul.u32 2, %s21
        %p310 = scmp.lt.s32.totalorder %s309, 3
        %s311 = scalar_select %p310, %s309, 3
        %s312 = smul.addr %s311, 8
        %s313 = scalar_lea.vmem %s0, %s312
        %p314 = pneg %p42
        %p315 = pneg %p39
        %p316 = pneg %p63
        %p317 = pneg %p60
        %p318 = pneg %p84
        %p319 = pneg %p81
        %p320 = pneg %p105
        %p321 = pneg %p102
        %p322 = pneg %p126
        %p323 = pneg %p123
        %p324 = pneg %p147
        %p325 = pneg %p144
        %p326 = pneg %p168
        %p327 = pneg %p165
        %p328 = pneg %p189
        %p329 = pneg %p186
        %p330 = pneg %p210
        %p331 = pneg %p207
        %p332 = pneg %p236
        %p333 = pneg %p233
        %s334 = smul.u32 2, %s21
        %p335 = scmp.lt.s32.totalorder %s334, 3
        %s336 = scalar_select %p335, %s334, 3
        %s337 = smul.addr %s336, 8
        %s338 = scalar_lea.vmem %s9, %s337
        %s339 = smul.u32 2, %s21
        %p340 = scmp.lt.s32.totalorder %s339, 3
        %s341 = scalar_select %p340, %s339, 3
        %s342 = smul.addr %s341, 8
        %s343 = scalar_lea.vmem %s0, %s342
        %s344 = smul.u32 2, %s21
        %s345 = smul.u32 2, %s21
        %p346 = scmp.lt.s32.totalorder %s345, 3
        %s347 = scalar_select %p346, %s345, 3
        %s348 = smul.addr %s347, 8
        %s349 = scalar_lea.vmem %s9, %s348
        %s350 = smul.u32 2, %s21
        %v352 = vld [vmem:[%s343] sm:$0xff]
        %v353 = vld [vmem:[%s343 + $0x8] sm:$0xff]
        %v354 = vld [vmem:[%s1] sm:$0xf]
        %v355 = vld [vmem:[%s1 + $0x4] sm:$0xf]
        %v356 = vpack.c.bf16 %v352, %v352
        %v357 = vpack.c.bf16 %v353, %v353
        %v358 = vld [vmem:[%s2] sm:$0xff]
        %v359 = vld [vmem:[%s2 + $0x8] sm:$0xff]
        %361 = vset.pattern.permute.xlu0 0
        %362 = vperm.xlu0 %361, %v358
        %v363 = vpop.permute.xlu0 %362
        %366 = vset.pattern.permute.xlu0 0
        %367 = vperm.xlu0 %366, %v359
        %v368 = vpop.permute.xlu0 %367
        %v372 = vunpack.c.l.b16 %v354
        %v373 = vunpack.c.l.b16 %v355
        %v374 = vpack.c.b16 %v373, %v372
        %vm375 = vcmask 64512
        %v377 = vsel %vm375, %v374, 0
        %vm379 = vcmask 1043456
        %v381 = vsel %vm379, %v356, 0
        %v384 = vsel %vm379, %v357, 0
        %386 = vmatprep.subr.bf16.mxu0 %v384
        %387 = vmatpush1.bf16.msra.mxu0 %v381
        %388 = vmatprep.subr.bf16.mxu0 0
        %389 = vmatpush1.bf16.msra.mxu0 0
        %390 = vmatprep.subr.bf16.mxu0 0
        %391 = vmatpush1.bf16.msra.mxu0 0
        %392 = vmatprep.subr.bf16.mxu0 0
        %393 = vmatpush1.bf16.msra.mxu0 0
        %394 = vmatprep.subr.bf16.mxu0 0
        %395 = vmatpush1.bf16.msra.mxu0 0
        %396 = vmatprep.subr.bf16.mxu0 0
        %397 = vmatpush1.bf16.msra.mxu0 0
        %398 = vmatprep.subr.bf16.mxu0 0
        %399 = vmatpush1.bf16.msra.mxu0 0
        %400 = vmatprep.subr.bf16.mxu0 0
        %401 = vmatpush1.bf16.msra.mxu0 0
        %402 = vmatprep.subr.bf16.mxu0 0
        %403 = vmatpush1.bf16.msra.mxu0 0
        %404 = vmatprep.subr.bf16.mxu0 0
        %405 = vmatpush1.bf16.msra.mxu0 0
        %406 = vmatprep.subr.bf16.mxu0 0
        %407 = vmatpush1.bf16.msra.mxu0 0
        %408 = vmatprep.subr.bf16.mxu0 0
        %409 = vmatpush1.bf16.msra.mxu0 0
        %410 = vmatprep.subr.bf16.mxu0 0
        %411 = vmatpush1.bf16.msra.mxu0 0
        %412 = vmatprep.subr.bf16.mxu0 0
        %413 = vmatpush1.bf16.msra.mxu0 0
        %414 = vmatprep.subr.bf16.mxu0 0
        %415 = vmatpush1.bf16.msra.mxu0 0
        %416 = vmatprep.subr.bf16.mxu0 0
        %417 = vmatpush1.bf16.msra.mxu0 0
        %418 = vmatprep.mubr.bf16.mxu0 0
        %419 = vmatmul.mubr.bf16.gmra.mrb[0].mxu0 %v377
        %v420 = vpop.f32.mrb[0].mxu0
        %v421 = vadd.f32 %v363, %v420
        %v422 = vpop.f32.mrb[0].mxu0
        %v423 = vadd.f32 %v363, %v422
        %v424 = vpop.f32.mrb[0].mxu0
        %v425 = vadd.f32 %v368, %v424
        %v426 = vpop.f32.mrb[0].mxu0
        %v427 = vadd.f32 %v368, %v426
        %428 = vdwg.mxu0
        %vm429 = vcmp.gt.f32.partialorder %v421, 0.0
        %vm430 = vcmp.gt.f32.partialorder %v423, 0.0
        %vm431 = vcmp.gt.f32.partialorder %v425, 0.0
        %vm432 = vcmp.gt.f32.partialorder %v427, 0.0
        %v433 = vld [vmem:[%s3] sm:$0xff]
        %v434 = vld [vmem:[%s3 + $0x8] sm:$0xff]
        %436 = vset.pattern.permute.xlu0 0
        %437 = vperm.xlu0 %436, %v433
        %v438 = vpop.permute.xlu0 %437
        %441 = vset.pattern.permute.xlu0 0
        %442 = vperm.xlu0 %441, %v434
        %v443 = vpop.permute.xlu0 %442
        %v445 = vmul.f32 %v421, %v438
        %v446 = vmul.f32 %v423, %v438
        %v447 = vmul.f32 %v425, %v443
        %v448 = vmul.f32 %v427, %v443
        %v449 = vsel %vm429, %v421, %v445
        %v450 = vsel %vm430, %v423, %v446
        %v451 = vsel %vm431, %v425, %v447
        %v452 = vsel %vm432, %v427, %v448
        %s453 = scalar_lea.vmem [#allocation2], 128
        %v454 = vld [vmem:[%s453] sm:$0xff]
        %v455 = vld [vmem:[%s453 + $0x8] sm:$0xff]
        %v456 = vld [vmem:[%s453 + $0x10] sm:$0xff]
        %v457 = vld [vmem:[%s453 + $0x18] sm:$0xff]
        %v458 = vmul.f32 %v449, %v454
        %v459 = vmul.f32 %v450, %v455
        %v460 = vmul.f32 %v451, %v456
        %v461 = vmul.f32 %v452, %v457
        %462 = vrot.lane.b32.xlu0 %v449, 17
        %v463 = vpop.permute.xlu0 %462
        %464 = vrot.lane.b32.xlu0 %v451, 17
        %v465 = vpop.permute.xlu0 %464
        %466 = vrot.lane.b32.xlu0 %v450, 17
        %v467 = vpop.permute.xlu0 %466
        %468 = vrot.lane.b32.xlu0 %v452, 17
        %v469 = vpop.permute.xlu0 %468
        %v470 = vlaneseq
        %v471 = vand.u32 %v470, 127
        %vm472 = vcmp.lt.s32.totalorder %v471, 17
        %v473 = vsel %vm472, %v463, %v467
        %v474 = vsel %vm472, %v465, %v469
        %v475 = vsel %vm472, %v467, %v463
        %v476 = vsel %vm472, %v469, %v465
        %v477 = vld [vmem:[#allocation2] sm:$0xff]
        %v478 = vld [vmem:[#allocation2 + $0x8] sm:$0xff]
        %v479 = vld [vmem:[#allocation2 + $0x10] sm:$0xff]
        %v480 = vld [vmem:[#allocation2 + $0x18] sm:$0xff]
        %v481 = vmul.f32 %v475, %v477
        %v482 = vmul.f32 %v473, %v478
        %v483 = vmul.f32 %v476, %v479
        %v484 = vmul.f32 %v474, %v480
        %v485 = vadd.f32 %v458, %v481
        %v486 = vadd.f32 %v459, %v482
        %v487 = vadd.f32 %v460, %v483
        %v488 = vadd.f32 %v461, %v484
        %489 = vrot.lane.b32.xlu0 %v449, 16
        %v490 = vpop.permute.xlu0 %489
        %491 = vrot.lane.b32.xlu0 %v451, 16
        %v492 = vpop.permute.xlu0 %491
        %493 = vrot.lane.b32.xlu0 %v450, 16
        %v494 = vpop.permute.xlu0 %493
        %495 = vrot.lane.b32.xlu0 %v452, 16
        %v496 = vpop.permute.xlu0 %495
        %vm497 = vcmp.lt.s32.totalorder %v471, 16
        %v498 = vsel %vm497, %v490, %v494
        %v499 = vsel %vm497, %v492, %v496
        %v500 = vsel %vm497, %v494, %v490
        %v501 = vsel %vm497, %v496, %v492
        %s502 = scalar_lea.vmem [#allocation2], 32
        %v503 = vld [vmem:[%s502] sm:$0xff]
        %v504 = vld [vmem:[%s502 + $0x8] sm:$0xff]
        %v505 = vld [vmem:[%s502 + $0x10] sm:$0xff]
        %v506 = vld [vmem:[%s502 + $0x18] sm:$0xff]
        %v507 = vmul.f32 %v500, %v503
        %v508 = vmul.f32 %v498, %v504
        %v509 = vmul.f32 %v501, %v505
        %v510 = vmul.f32 %v499, %v506
        %v511 = vadd.f32 %v485, %v507
        %v512 = vadd.f32 %v486, %v508
        %v513 = vadd.f32 %v487, %v509
        %v514 = vadd.f32 %v488, %v510
        %515 = vrot.lane.b32.xlu0 %v449, 15
        %v516 = vpop.permute.xlu0 %515
        %517 = vrot.lane.b32.xlu0 %v451, 15
        %v518 = vpop.permute.xlu0 %517
        %519 = vrot.lane.b32.xlu0 %v450, 15
        %v520 = vpop.permute.xlu0 %519
        %521 = vrot.lane.b32.xlu0 %v452, 15
        %v522 = vpop.permute.xlu0 %521
        %vm523 = vcmp.lt.s32.totalorder %v471, 15
        %v524 = vsel %vm523, %v516, %v520
        %v525 = vsel %vm523, %v518, %v522
        %v526 = vsel %vm523, %v520, %v516
        %v527 = vsel %vm523, %v522, %v518
        %s528 = scalar_lea.vmem [#allocation2], 64
        %v529 = vld [vmem:[%s528] sm:$0xff]
        %v530 = vld [vmem:[%s528 + $0x8] sm:$0xff]
        %v531 = vld [vmem:[%s528 + $0x10] sm:$0xff]
        %v532 = vld [vmem:[%s528 + $0x18] sm:$0xff]
        %v533 = vmul.f32 %v526, %v529
        %v534 = vmul.f32 %v524, %v530
        %v535 = vmul.f32 %v527, %v531
        %v536 = vmul.f32 %v525, %v532
        %v537 = vadd.f32 %v511, %v533
        %v538 = vadd.f32 %v512, %v534
        %v539 = vadd.f32 %v513, %v535
        %v540 = vadd.f32 %v514, %v536
        %541 = vrot.lane.b32.xlu0 %v449, 1
        %v542 = vpop.permute.xlu0 %541
        %543 = vrot.lane.b32.xlu0 %v451, 1
        %v544 = vpop.permute.xlu0 %543
        %545 = vrot.lane.b32.xlu0 %v450, 1
        %v546 = vpop.permute.xlu0 %545
        %547 = vrot.lane.b32.xlu0 %v452, 1
        %v548 = vpop.permute.xlu0 %547
        %vm549 = vcmp.lt.s32.totalorder %v471, 1
        %v550 = vsel %vm549, %v542, %v546
        %v551 = vsel %vm549, %v544, %v548
        %v552 = vsel %vm549, %v546, %v542
        %v553 = vsel %vm549, %v548, %v544
        %s554 = scalar_lea.vmem [#allocation2], 96
        %v555 = vld [vmem:[%s554] sm:$0xff]
        %v556 = vld [vmem:[%s554 + $0x8] sm:$0xff]
        %v557 = vld [vmem:[%s554 + $0x10] sm:$0xff]
        %v558 = vld [vmem:[%s554 + $0x18] sm:$0xff]
        %v559 = vmul.f32 %v552, %v555
        %v560 = vmul.f32 %v550, %v556
        %v561 = vmul.f32 %v553, %v557
        %v562 = vmul.f32 %v551, %v558
        %v563 = vadd.f32 %v537, %v559
        %v564 = vadd.f32 %v538, %v560
        %v565 = vadd.f32 %v539, %v561
        %v566 = vadd.f32 %v540, %v562
        %567 = vrot.lane.b32.xlu0 %v449, 127
        %v568 = vpop.permute.xlu0 %567
        %569 = vrot.lane.b32.xlu0 %v451, 127
        %v570 = vpop.permute.xlu0 %569
        %571 = vrot.lane.b32.xlu0 %v450, 127
        %v572 = vpop.permute.xlu0 %571
        %573 = vrot.lane.b32.xlu0 %v452, 127
        %v574 = vpop.permute.xlu0 %573
        %vm575 = vcmp.lt.s32.totalorder %v471, 127
        %v576 = vsel %vm575, %v568, %v572
        %v577 = vsel %vm575, %v570, %v574
        %v578 = vsel %vm575, %v572, %v568
        %v579 = vsel %vm575, %v574, %v570
        %s580 = scalar_lea.vmem [#allocation2], 160
        %v581 = vld [vmem:[%s580] sm:$0xff]
        %v582 = vld [vmem:[%s580 + $0x8] sm:$0xff]
        %v583 = vld [vmem:[%s580 + $0x10] sm:$0xff]
        %v584 = vld [vmem:[%s580 + $0x18] sm:$0xff]
        %v585 = vmul.f32 %v576, %v581
        %v586 = vmul.f32 %v578, %v582
        %v587 = vmul.f32 %v577, %v583
        %v588 = vmul.f32 %v579, %v584
        %v589 = vadd.f32 %v563, %v585
        %v590 = vadd.f32 %v564, %v586
        %v591 = vadd.f32 %v565, %v587
        %v592 = vadd.f32 %v566, %v588
        %593 = vrot.lane.b32.xlu0 %v449, 113
        %v594 = vpop.permute.xlu0 %593
        %595 = vrot.lane.b32.xlu0 %v451, 113
        %v596 = vpop.permute.xlu0 %595
        %597 = vrot.lane.b32.xlu0 %v450, 113
        %v598 = vpop.permute.xlu0 %597
        %599 = vrot.lane.b32.xlu0 %v452, 113
        %v600 = vpop.permute.xlu0 %599
        %vm601 = vcmp.lt.s32.totalorder %v471, 113
        %v602 = vsel %vm601, %v594, %v598
        %v603 = vsel %vm601, %v596, %v600
        %v604 = vsel %vm601, %v598, %v594
        %v605 = vsel %vm601, %v600, %v596
        %s606 = scalar_lea.vmem [#allocation2], 192
        %v607 = vld [vmem:[%s606] sm:$0xff]
        %v608 = vld [vmem:[%s606 + $0x8] sm:$0xff]
        %v609 = vld [vmem:[%s606 + $0x10] sm:$0xff]
        %v610 = vld [vmem:[%s606 + $0x18] sm:$0xff]
        %v611 = vmul.f32 %v602, %v607
        %v612 = vmul.f32 %v604, %v608
        %v613 = vmul.f32 %v603, %v609
        %v614 = vmul.f32 %v605, %v610
        %v615 = vadd.f32 %v589, %v611
        %v616 = vadd.f32 %v590, %v612
        %v617 = vadd.f32 %v591, %v613
        %v618 = vadd.f32 %v592, %v614
        %619 = vrot.lane.b32.xlu0 %v449, 112
        %v620 = vpop.permute.xlu0 %619
        %621 = vrot.lane.b32.xlu0 %v451, 112
        %v622 = vpop.permute.xlu0 %621
        %623 = vrot.lane.b32.xlu0 %v450, 112
        %v624 = vpop.permute.xlu0 %623
        %625 = vrot.lane.b32.xlu0 %v452, 112
        %v626 = vpop.permute.xlu0 %625
        %vm627 = vcmp.lt.s32.totalorder %v471, 112
        %v628 = vsel %vm627, %v620, %v624
        %v629 = vsel %vm627, %v622, %v626
        %v630 = vsel %vm627, %v624, %v620
        %v631 = vsel %vm627, %v626, %v622
        %s632 = scalar_lea.vmem [#allocation2], 224
        %v633 = vld [vmem:[%s632] sm:$0xff]
        %v634 = vld [vmem:[%s632 + $0x8] sm:$0xff]
        %v635 = vld [vmem:[%s632 + $0x10] sm:$0xff]
        %v636 = vld [vmem:[%s632 + $0x18] sm:$0xff]
        %v637 = vmul.f32 %v628, %v633
        %v638 = vmul.f32 %v630, %v634
        %v639 = vmul.f32 %v629, %v635
        %v640 = vmul.f32 %v631, %v636
        %v641 = vadd.f32 %v615, %v637
        %v642 = vadd.f32 %v616, %v638
        %v643 = vadd.f32 %v617, %v639
        %v644 = vadd.f32 %v618, %v640
        %645 = vrot.lane.b32.xlu0 %v449, 111
        %v646 = vpop.permute.xlu0 %645
        %647 = vrot.lane.b32.xlu0 %v451, 111
        %v648 = vpop.permute.xlu0 %647
        %649 = vrot.lane.b32.xlu0 %v450, 111
        %v650 = vpop.permute.xlu0 %649
        %651 = vrot.lane.b32.xlu0 %v452, 111
        %v652 = vpop.permute.xlu0 %651
        %vm653 = vcmp.lt.s32.totalorder %v471, 111
        %v654 = vsel %vm653, %v646, %v650
        %v655 = vsel %vm653, %v648, %v652
        %v656 = vsel %vm653, %v650, %v646
        %v657 = vsel %vm653, %v652, %v648
        %s658 = scalar_lea.vmem [#allocation2], 256
        %v659 = vld [vmem:[%s658] sm:$0xff]
        %v660 = vld [vmem:[%s658 + $0x8] sm:$0xff]
        %v661 = vld [vmem:[%s658 + $0x10] sm:$0xff]
        %v662 = vld [vmem:[%s658 + $0x18] sm:$0xff]
        %v663 = vmul.f32 %v654, %v659
        %v664 = vmul.f32 %v656, %v660
        %v665 = vmul.f32 %v655, %v661
        %v666 = vmul.f32 %v657, %v662
        %v667 = vadd.f32 %v641, %v663
        %v668 = vadd.f32 %v642, %v664
        %v669 = vadd.f32 %v643, %v665
        %v670 = vadd.f32 %v644, %v666
        %v671 = vld [vmem:[%s5] sm:$0xff]
        %v672 = vld [vmem:[%s5 + $0x8] sm:$0xff]
        %674 = vset.pattern.permute.xlu0 0
        %675 = vperm.xlu0 %674, %v671
        %v676 = vpop.permute.xlu0 %675
        %679 = vset.pattern.permute.xlu0 0
        %680 = vperm.xlu0 %679, %v672
        %v681 = vpop.permute.xlu0 %680
        %v683 = vadd.f32 %v667, %v676
        %v684 = vadd.f32 %v668, %v676
        %v685 = vadd.f32 %v669, %v681
        %v686 = vadd.f32 %v670, %v681
        %vm687 = vcmp.gt.f32.partialorder %v683, 0.0
        %vm688 = vcmp.gt.f32.partialorder %v684, 0.0
        %vm689 = vcmp.gt.f32.partialorder %v685, 0.0
        %vm690 = vcmp.gt.f32.partialorder %v686, 0.0
        %v691 = vld [vmem:[%s6] sm:$0xff]
        %v692 = vld [vmem:[%s6 + $0x8] sm:$0xff]
        %694 = vset.pattern.permute.xlu0 0
        %695 = vperm.xlu0 %694, %v691
        %v696 = vpop.permute.xlu0 %695
        %699 = vset.pattern.permute.xlu0 0
        %700 = vperm.xlu0 %699, %v692
        %v701 = vpop.permute.xlu0 %700
        %v703 = vmul.f32 %v683, %v696
        %v704 = vmul.f32 %v684, %v696
        %v705 = vmul.f32 %v685, %v701
        %v706 = vmul.f32 %v686, %v701
        %v707 = vsel %vm687, %v683, %v703
        %v708 = vsel %vm688, %v684, %v704
        %v709 = vsel %vm689, %v685, %v705
        %v710 = vsel %vm690, %v686, %v706
        %v711 = vld [vmem:[%s7] sm:$0xf]
        %v712 = vpack.c.bf16 %v709, %v707
        %v713 = vpack.c.bf16 %v710, %v708
        %v714 = vld [vmem:[%s8] sm:$0xff]
        %716 = vset.pattern.permute.xlu0 0
        %717 = vperm.xlu0 %716, %v714
        %v718 = vpop.permute.xlu0 %717
        %vm720 = vcmask 130048
        %v722 = vsel %vm720, %v711, 0
        %724 = vmatprep.subr.bf16.mxu0 %v713
        %725 = vmatpush1.bf16.msra.mxu0 %v712
        %726 = vmatprep.subr.bf16.mxu0 0
        %727 = vmatpush1.bf16.msra.mxu0 0
        %728 = vmatprep.subr.bf16.mxu0 0
        %729 = vmatpush1.bf16.msra.mxu0 0
        %730 = vmatprep.subr.bf16.mxu0 0
        %731 = vmatpush1.bf16.msra.mxu0 0
        %732 = vmatprep.subr.bf16.mxu0 0
        %733 = vmatpush1.bf16.msra.mxu0 0
        %734 = vmatprep.subr.bf16.mxu0 0
        %735 = vmatpush1.bf16.msra.mxu0 0
        %736 = vmatprep.subr.bf16.mxu0 0
        %737 = vmatpush1.bf16.msra.mxu0 0
        %738 = vmatprep.subr.bf16.mxu0 0
        %739 = vmatpush1.bf16.msra.mxu0 0
        %740 = vmatprep.subr.bf16.mxu0 0
        %741 = vmatpush1.bf16.msra.mxu0 0
        %742 = vmatprep.subr.bf16.mxu0 0
        %743 = vmatpush1.bf16.msra.mxu0 0
        %744 = vmatprep.subr.bf16.mxu0 0
        %745 = vmatpush1.bf16.msra.mxu0 0
        %746 = vmatprep.subr.bf16.mxu0 0
        %747 = vmatpush1.bf16.msra.mxu0 0
        %748 = vmatprep.subr.bf16.mxu0 0
        %749 = vmatpush1.bf16.msra.mxu0 0
        %750 = vmatprep.subr.bf16.mxu0 0
        %751 = vmatpush1.bf16.msra.mxu0 0
        %752 = vmatprep.subr.bf16.mxu0 0
        %753 = vmatpush1.bf16.msra.mxu0 0
        %754 = vmatprep.subr.bf16.mxu0 0
        %755 = vmatpush1.bf16.msra.mxu0 0
        %756 = vmatprep.mubr.bf16.mxu0 0
        %757 = vmatmul.mubr.bf16.gmra.mrb[0].mxu0 %v722
        %v758 = vpop.f32.mrb[0].mxu0
        %v759 = vadd.f32 %v718, %v758
        %v760 = vpop.f32.mrb[0].mxu0
        %v761 = vadd.f32 %v718, %v760
        %v762 = vpop.f32.mrb[0].mxu0
        %v763 = vpop.f32.mrb[0].mxu0
        %764 = vdwg.mxu0
        %v765 = vadd.f32 %v759, %v352
        %v766 = vadd.f32 %v761, %v353
        %s767 = scalar_lea.vmem %s1, 8
        %v768 = vld [vmem:[%s767] sm:$0xf]
        %v769 = vld [vmem:[%s767 + $0x4] sm:$0xf]
        %v770 = vpack.c.bf16 %v765, %v765
        %v771 = vpack.c.bf16 %v766, %v766
        %s772 = scalar_lea.vmem %s2, 16
        %v773 = vld [vmem:[%s772] sm:$0xff]
        %v774 = vld [vmem:[%s772 + $0x8] sm:$0xff]
        %776 = vset.pattern.permute.xlu0 0
        %777 = vperm.xlu0 %776, %v773
        %v778 = vpop.permute.xlu0 %777
        %781 = vset.pattern.permute.xlu0 0
        %782 = vperm.xlu0 %781, %v774
        %v783 = vpop.permute.xlu0 %782
        %v787 = vunpack.c.l.b16 %v768
        %v788 = vunpack.c.l.b16 %v769
        %v789 = vpack.c.b16 %v788, %v787
        %v791 = vsel %vm375, %v789, 0
        %v794 = vsel %vm379, %v770, 0
        %v797 = vsel %vm379, %v771, 0
        %799 = vmatprep.subr.bf16.mxu0 %v797
        %800 = vmatpush1.bf16.msra.mxu0 %v794
        %801 = vmatprep.subr.bf16.mxu0 0
        %802 = vmatpush1.bf16.msra.mxu0 0
        %803 = vmatprep.subr.bf16.mxu0 0
        %804 = vmatpush1.bf16.msra.mxu0 0
        %805 = vmatprep.subr.bf16.mxu0 0
        %806 = vmatpush1.bf16.msra.mxu0 0
        %807 = vmatprep.subr.bf16.mxu0 0
        %808 = vmatpush1.bf16.msra.mxu0 0
        %809 = vmatprep.subr.bf16.mxu0 0
        %810 = vmatpush1.bf16.msra.mxu0 0
        %811 = vmatprep.subr.bf16.mxu0 0
        %812 = vmatpush1.bf16.msra.mxu0 0
        %813 = vmatprep.subr.bf16.mxu0 0
        %814 = vmatpush1.bf16.msra.mxu0 0
        %815 = vmatprep.subr.bf16.mxu0 0
        %816 = vmatpush1.bf16.msra.mxu0 0
        %817 = vmatprep.subr.bf16.mxu0 0
        %818 = vmatpush1.bf16.msra.mxu0 0
        %819 = vmatprep.subr.bf16.mxu0 0
        %820 = vmatpush1.bf16.msra.mxu0 0
        %821 = vmatprep.subr.bf16.mxu0 0
        %822 = vmatpush1.bf16.msra.mxu0 0
        %823 = vmatprep.subr.bf16.mxu0 0
        %824 = vmatpush1.bf16.msra.mxu0 0
        %825 = vmatprep.subr.bf16.mxu0 0
        %826 = vmatpush1.bf16.msra.mxu0 0
        %827 = vmatprep.subr.bf16.mxu0 0
        %828 = vmatpush1.bf16.msra.mxu0 0
        %829 = vmatprep.subr.bf16.mxu0 0
        %830 = vmatpush1.bf16.msra.mxu0 0
        %831 = vmatprep.mubr.bf16.mxu0 0
        %832 = vmatmul.mubr.bf16.gmra.mrb[0].mxu0 %v791
        %v833 = vpop.f32.mrb[0].mxu0
        %v834 = vadd.f32 %v778, %v833
        %v835 = vpop.f32.mrb[0].mxu0
        %v836 = vadd.f32 %v778, %v835
        %v837 = vpop.f32.mrb[0].mxu0
        %v838 = vadd.f32 %v783, %v837
        %v839 = vpop.f32.mrb[0].mxu0
        %v840 = vadd.f32 %v783, %v839
        %841 = vdwg.mxu0
        %vm842 = vcmp.gt.f32.partialorder %v834, 0.0
        %vm843 = vcmp.gt.f32.partialorder %v836, 0.0
        %vm844 = vcmp.gt.f32.partialorder %v838, 0.0
        %vm845 = vcmp.gt.f32.partialorder %v840, 0.0
        %s846 = scalar_lea.vmem %s3, 16
        %v847 = vld [vmem:[%s846] sm:$0xff]
        %v848 = vld [vmem:[%s846 + $0x8] sm:$0xff]
        %850 = vset.pattern.permute.xlu0 0
        %851 = vperm.xlu0 %850, %v847
        %v852 = vpop.permute.xlu0 %851
        %855 = vset.pattern.permute.xlu0 0
        %856 = vperm.xlu0 %855, %v848
        %v857 = vpop.permute.xlu0 %856
        %v859 = vmul.f32 %v834, %v852
        %v860 = vmul.f32 %v836, %v852
        %v861 = vmul.f32 %v838, %v857
        %v862 = vmul.f32 %v840, %v857
        %v863 = vsel %vm842, %v834, %v859
        %v864 = vsel %vm843, %v836, %v860
        %v865 = vsel %vm844, %v838, %v861
        %v866 = vsel %vm845, %v840, %v862
        %s867 = scalar_lea.vmem [#allocation2], 416
        %v868 = vld [vmem:[%s867] sm:$0xff]
        %v869 = vld [vmem:[%s867 + $0x8] sm:$0xff]
        %v870 = vld [vmem:[%s867 + $0x10] sm:$0xff]
        %v871 = vld [vmem:[%s867 + $0x18] sm:$0xff]
        %v872 = vmul.f32 %v863, %v868
        %v873 = vmul.f32 %v864, %v869
        %v874 = vmul.f32 %v865, %v870
        %v875 = vmul.f32 %v866, %v871
        %876 = vrot.lane.b32.xlu0 %v863, 17
        %v877 = vpop.permute.xlu0 %876
        %878 = vrot.lane.b32.xlu0 %v865, 17
        %v879 = vpop.permute.xlu0 %878
        %880 = vrot.lane.b32.xlu0 %v864, 17
        %v881 = vpop.permute.xlu0 %880
        %882 = vrot.lane.b32.xlu0 %v866, 17
        %v883 = vpop.permute.xlu0 %882
        %v884 = vsel %vm472, %v877, %v881
        %v885 = vsel %vm472, %v879, %v883
        %v886 = vsel %vm472, %v881, %v877
        %v887 = vsel %vm472, %v883, %v879
        %s888 = scalar_lea.vmem [#allocation2], 288
        %v889 = vld [vmem:[%s888] sm:$0xff]
        %v890 = vld [vmem:[%s888 + $0x8] sm:$0xff]
        %v891 = vld [vmem:[%s888 + $0x10] sm:$0xff]
        %v892 = vld [vmem:[%s888 + $0x18] sm:$0xff]
        %v893 = vmul.f32 %v886, %v889
        %v894 = vmul.f32 %v884, %v890
        %v895 = vmul.f32 %v887, %v891
        %v896 = vmul.f32 %v885, %v892
        %v897 = vadd.f32 %v872, %v893
        %v898 = vadd.f32 %v873, %v894
        %v899 = vadd.f32 %v874, %v895
        %v900 = vadd.f32 %v875, %v896
        %901 = vrot.lane.b32.xlu0 %v863, 16
        %v902 = vpop.permute.xlu0 %901
        %903 = vrot.lane.b32.xlu0 %v865, 16
        %v904 = vpop.permute.xlu0 %903
        %905 = vrot.lane.b32.xlu0 %v864, 16
        %v906 = vpop.permute.xlu0 %905
        %907 = vrot.lane.b32.xlu0 %v866, 16
        %v908 = vpop.permute.xlu0 %907
        %v909 = vsel %vm497, %v902, %v906
        %v910 = vsel %vm497, %v904, %v908
        %v911 = vsel %vm497, %v906, %v902
        %v912 = vsel %vm497, %v908, %v904
        %s913 = scalar_lea.vmem [#allocation2], 320
        %v914 = vld [vmem:[%s913] sm:$0xff]
        %v915 = vld [vmem:[%s913 + $0x8] sm:$0xff]
        %v916 = vld [vmem:[%s913 + $0x10] sm:$0xff]
        %v917 = vld [vmem:[%s913 + $0x18] sm:$0xff]
        %v918 = vmul.f32 %v911, %v914
        %v919 = vmul.f32 %v909, %v915
        %v920 = vmul.f32 %v912, %v916
        %v921 = vmul.f32 %v910, %v917
        %v922 = vadd.f32 %v897, %v918
        %v923 = vadd.f32 %v898, %v919
        %v924 = vadd.f32 %v899, %v920
        %v925 = vadd.f32 %v900, %v921
        %926 = vrot.lane.b32.xlu0 %v863, 15
        %v927 = vpop.permute.xlu0 %926
        %928 = vrot.lane.b32.xlu0 %v865, 15
        %v929 = vpop.permute.xlu0 %928
        %930 = vrot.lane.b32.xlu0 %v864, 15
        %v931 = vpop.permute.xlu0 %930
        %932 = vrot.lane.b32.xlu0 %v866, 15
        %v933 = vpop.permute.xlu0 %932
        %v934 = vsel %vm523, %v927, %v931
        %v935 = vsel %vm523, %v929, %v933
        %v936 = vsel %vm523, %v931, %v927
        %v937 = vsel %vm523, %v933, %v929
        %s938 = scalar_lea.vmem [#allocation2], 352
        %v939 = vld [vmem:[%s938] sm:$0xff]
        %v940 = vld [vmem:[%s938 + $0x8] sm:$0xff]
        %v941 = vld [vmem:[%s938 + $0x10] sm:$0xff]
        %v942 = vld [vmem:[%s938 + $0x18] sm:$0xff]
        %v943 = vmul.f32 %v936, %v939
        %v944 = vmul.f32 %v934, %v940
        %v945 = vmul.f32 %v937, %v941
        %v946 = vmul.f32 %v935, %v942
        %v947 = vadd.f32 %v922, %v943
        %v948 = vadd.f32 %v923, %v944
        %v949 = vadd.f32 %v924, %v945
        %v950 = vadd.f32 %v925, %v946
        %951 = vrot.lane.b32.xlu0 %v863, 1
        %v952 = vpop.permute.xlu0 %951
        %953 = vrot.lane.b32.xlu0 %v865, 1
        %v954 = vpop.permute.xlu0 %953
        %955 = vrot.lane.b32.xlu0 %v864, 1
        %v956 = vpop.permute.xlu0 %955
        %957 = vrot.lane.b32.xlu0 %v866, 1
        %v958 = vpop.permute.xlu0 %957
        %v959 = vsel %vm549, %v952, %v956
        %v960 = vsel %vm549, %v954, %v958
        %v961 = vsel %vm549, %v956, %v952
        %v962 = vsel %vm549, %v958, %v954
        %s963 = scalar_lea.vmem [#allocation2], 384
        %v964 = vld [vmem:[%s963] sm:$0xff]
        %v965 = vld [vmem:[%s963 + $0x8] sm:$0xff]
        %v966 = vld [vmem:[%s963 + $0x10] sm:$0xff]
        %v967 = vld [vmem:[%s963 + $0x18] sm:$0xff]
        %v968 = vmul.f32 %v961, %v964
        %v969 = vmul.f32 %v959, %v965
        %v970 = vmul.f32 %v962, %v966
        %v971 = vmul.f32 %v960, %v967
        %v972 = vadd.f32 %v947, %v968
        %v973 = vadd.f32 %v948, %v969
        %v974 = vadd.f32 %v949, %v970
        %v975 = vadd.f32 %v950, %v971
        %976 = vrot.lane.b32.xlu0 %v863, 127
        %v977 = vpop.permute.xlu0 %976
        %978 = vrot.lane.b32.xlu0 %v865, 127
        %v979 = vpop.permute.xlu0 %978
        %980 = vrot.lane.b32.xlu0 %v864, 127
        %v981 = vpop.permute.xlu0 %980
        %982 = vrot.lane.b32.xlu0 %v866, 127
        %v983 = vpop.permute.xlu0 %982
        %v984 = vsel %vm575, %v977, %v981
        %v985 = vsel %vm575, %v979, %v983
        %v986 = vsel %vm575, %v981, %v977
        %v987 = vsel %vm575, %v983, %v979
        %s988 = scalar_lea.vmem [#allocation2], 448
        %v989 = vld [vmem:[%s988] sm:$0xff]
        %v990 = vld [vmem:[%s988 + $0x8] sm:$0xff]
        %v991 = vld [vmem:[%s988 + $0x10] sm:$0xff]
        %v992 = vld [vmem:[%s988 + $0x18] sm:$0xff]
        %v993 = vmul.f32 %v984, %v989
        %v994 = vmul.f32 %v986, %v990
        %v995 = vmul.f32 %v985, %v991
        %v996 = vmul.f32 %v987, %v992
        %v997 = vadd.f32 %v972, %v993
        %v998 = vadd.f32 %v973, %v994
        %v999 = vadd.f32 %v974, %v995
        %v1000 = vadd.f32 %v975, %v996
        %1001 = vrot.lane.b32.xlu0 %v863, 113
        %v1002 = vpop.permute.xlu0 %1001
        %1003 = vrot.lane.b32.xlu0 %v865, 113
        %v1004 = vpop.permute.xlu0 %1003
        %1005 = vrot.lane.b32.xlu0 %v864, 113
        %v1006 = vpop.permute.xlu0 %1005
        %1007 = vrot.lane.b32.xlu0 %v866, 113
        %v1008 = vpop.permute.xlu0 %1007
        %v1009 = vsel %vm601, %v1002, %v1006
        %v1010 = vsel %vm601, %v1004, %v1008
        %v1011 = vsel %vm601, %v1006, %v1002
        %v1012 = vsel %vm601, %v1008, %v1004
        %s1013 = scalar_lea.vmem [#allocation2], 480
        %v1014 = vld [vmem:[%s1013] sm:$0xff]
        %v1015 = vld [vmem:[%s1013 + $0x8] sm:$0xff]
        %v1016 = vld [vmem:[%s1013 + $0x10] sm:$0xff]
        %v1017 = vld [vmem:[%s1013 + $0x18] sm:$0xff]
        %v1018 = vmul.f32 %v1009, %v1014
        %v1019 = vmul.f32 %v1011, %v1015
        %v1020 = vmul.f32 %v1010, %v1016
        %v1021 = vmul.f32 %v1012, %v1017
        %v1022 = vadd.f32 %v997, %v1018
        %v1023 = vadd.f32 %v998, %v1019
        %v1024 = vadd.f32 %v999, %v1020
        %v1025 = vadd.f32 %v1000, %v1021
        %1026 = vrot.lane.b32.xlu0 %v863, 112
        %v1027 = vpop.permute.xlu0 %1026
        %1028 = vrot.lane.b32.xlu0 %v865, 112
        %v1029 = vpop.permute.xlu0 %1028
        %1030 = vrot.lane.b32.xlu0 %v864, 112
        %v1031 = vpop.permute.xlu0 %1030
        %1032 = vrot.lane.b32.xlu0 %v866, 112
        %v1033 = vpop.permute.xlu0 %1032
        %v1034 = vsel %vm627, %v1027, %v1031
        %v1035 = vsel %vm627, %v1029, %v1033
        %v1036 = vsel %vm627, %v1031, %v1027
        %v1037 = vsel %vm627, %v1033, %v1029
        %s1038 = scalar_lea.vmem [#allocation2], 512
        %v1039 = vld [vmem:[%s1038] sm:$0xff]
        %v1040 = vld [vmem:[%s1038 + $0x8] sm:$0xff]
        %v1041 = vld [vmem:[%s1038 + $0x10] sm:$0xff]
        %v1042 = vld [vmem:[%s1038 + $0x18] sm:$0xff]
        %v1043 = vmul.f32 %v1034, %v1039
        %v1044 = vmul.f32 %v1036, %v1040
        %v1045 = vmul.f32 %v1035, %v1041
        %v1046 = vmul.f32 %v1037, %v1042
        %v1047 = vadd.f32 %v1022, %v1043
        %v1048 = vadd.f32 %v1023, %v1044
        %v1049 = vadd.f32 %v1024, %v1045
        %v1050 = vadd.f32 %v1025, %v1046
        %1051 = vrot.lane.b32.xlu0 %v863, 111
        %v1052 = vpop.permute.xlu0 %1051
        %1053 = vrot.lane.b32.xlu0 %v865, 111
        %v1054 = vpop.permute.xlu0 %1053
        %1055 = vrot.lane.b32.xlu0 %v864, 111
        %v1056 = vpop.permute.xlu0 %1055
        %1057 = vrot.lane.b32.xlu0 %v866, 111
        %v1058 = vpop.permute.xlu0 %1057
        %v1059 = vsel %vm653, %v1052, %v1056
        %v1060 = vsel %vm653, %v1054, %v1058
        %v1061 = vsel %vm653, %v1056, %v1052
        %v1062 = vsel %vm653, %v1058, %v1054
        %s1063 = scalar_lea.vmem [#allocation2], 544
        %v1064 = vld [vmem:[%s1063] sm:$0xff]
        %v1065 = vld [vmem:[%s1063 + $0x8] sm:$0xff]
        %v1066 = vld [vmem:[%s1063 + $0x10] sm:$0xff]
        %v1067 = vld [vmem:[%s1063 + $0x18] sm:$0xff]
        %v1068 = vmul.f32 %v1059, %v1064
        %v1069 = vmul.f32 %v1061, %v1065
        %v1070 = vmul.f32 %v1060, %v1066
        %v1071 = vmul.f32 %v1062, %v1067
        %v1072 = vadd.f32 %v1047, %v1068
        %v1073 = vadd.f32 %v1048, %v1069
        %v1074 = vadd.f32 %v1049, %v1070
        %v1075 = vadd.f32 %v1050, %v1071
        %s1076 = scalar_lea.vmem %s5, 16
        %v1077 = vld [vmem:[%s1076] sm:$0xff]
        %v1078 = vld [vmem:[%s1076 + $0x8] sm:$0xff]
        %1080 = vset.pattern.permute.xlu0 0
        %1081 = vperm.xlu0 %1080, %v1077
        %v1082 = vpop.permute.xlu0 %1081
        %1085 = vset.pattern.permute.xlu0 0
        %1086 = vperm.xlu0 %1085, %v1078
        %v1087 = vpop.permute.xlu0 %1086
        %v1089 = vadd.f32 %v1072, %v1082
        %v1090 = vadd.f32 %v1073, %v1082
        %v1091 = vadd.f32 %v1074, %v1087
        %v1092 = vadd.f32 %v1075, %v1087
        %vm1093 = vcmp.gt.f32.partialorder %v1089, 0.0
        %vm1094 = vcmp.gt.f32.partialorder %v1090, 0.0
        %vm1095 = vcmp.gt.f32.partialorder %v1091, 0.0
        %vm1096 = vcmp.gt.f32.partialorder %v1092, 0.0
        %s1097 = scalar_lea.vmem %s6, 16
        %v1098 = vld [vmem:[%s1097] sm:$0xff]
        %v1099 = vld [vmem:[%s1097 + $0x8] sm:$0xff]
        %1101 = vset.pattern.permute.xlu0 0
        %1102 = vperm.xlu0 %1101, %v1098
        %v1103 = vpop.permute.xlu0 %1102
        %1106 = vset.pattern.permute.xlu0 0
        %1107 = vperm.xlu0 %1106, %v1099
        %v1108 = vpop.permute.xlu0 %1107
        %v1110 = vmul.f32 %v1089, %v1103
        %v1111 = vmul.f32 %v1090, %v1103
        %v1112 = vmul.f32 %v1091, %v1108
        %v1113 = vmul.f32 %v1092, %v1108
        %v1114 = vsel %vm1093, %v1089, %v1110
        %v1115 = vsel %vm1094, %v1090, %v1111
        %v1116 = vsel %vm1095, %v1091, %v1112
        %v1117 = vsel %vm1096, %v1092, %v1113
        %s1118 = scalar_lea.vmem %s7, 4
        %v1119 = vld [vmem:[%s1118] sm:$0xf]
        %v1120 = vpack.c.bf16 %v1116, %v1114
        %v1121 = vpack.c.bf16 %v1117, %v1115
        %s1122 = scalar_lea.vmem %s8, 8
        %v1123 = vld [vmem:[%s1122] sm:$0xff]
        %1125 = vset.pattern.permute.xlu0 0
        %1126 = vperm.xlu0 %1125, %v1123
        %v1127 = vpop.permute.xlu0 %1126
        %v1130 = vsel %vm720, %v1119, 0
        %1132 = vmatprep.subr.bf16.mxu0 %v1121
        %1133 = vmatpush1.bf16.msra.mxu0 %v1120
        %1134 = vmatprep.subr.bf16.mxu0 0
        %1135 = vmatpush1.bf16.msra.mxu0 0
        %1136 = vmatprep.subr.bf16.mxu0 0
        %1137 = vmatpush1.bf16.msra.mxu0 0
        %1138 = vmatprep.subr.bf16.mxu0 0
        %1139 = vmatpush1.bf16.msra.mxu0 0
        %1140 = vmatprep.subr.bf16.mxu0 0
        %1141 = vmatpush1.bf16.msra.mxu0 0
        %1142 = vmatprep.subr.bf16.mxu0 0
        %1143 = vmatpush1.bf16.msra.mxu0 0
        %1144 = vmatprep.subr.bf16.mxu0 0
        %1145 = vmatpush1.bf16.msra.mxu0 0
        %1146 = vmatprep.subr.bf16.mxu0 0
        %1147 = vmatpush1.bf16.msra.mxu0 0
        %1148 = vmatprep.subr.bf16.mxu0 0
        %1149 = vmatpush1.bf16.msra.mxu0 0
        %1150 = vmatprep.subr.bf16.mxu0 0
        %1151 = vmatpush1.bf16.msra.mxu0 0
        %1152 = vmatprep.subr.bf16.mxu0 0
        %1153 = vmatpush1.bf16.msra.mxu0 0
        %1154 = vmatprep.subr.bf16.mxu0 0
        %1155 = vmatpush1.bf16.msra.mxu0 0
        %1156 = vmatprep.subr.bf16.mxu0 0
        %1157 = vmatpush1.bf16.msra.mxu0 0
        %1158 = vmatprep.subr.bf16.mxu0 0
        %1159 = vmatpush1.bf16.msra.mxu0 0
        %1160 = vmatprep.subr.bf16.mxu0 0
        %1161 = vmatpush1.bf16.msra.mxu0 0
        %1162 = vmatprep.subr.bf16.mxu0 0
        %1163 = vmatpush1.bf16.msra.mxu0 0
        %1164 = vmatprep.mubr.bf16.mxu0 0
        %1165 = vmatmul.mubr.bf16.gmra.mrb[0].mxu0 %v1130
        %v1166 = vpop.f32.mrb[0].mxu0
        %v1167 = vadd.f32 %v1127, %v1166
        %v1168 = vpop.f32.mrb[0].mxu0
        %v1169 = vadd.f32 %v1127, %v1168
        %v1170 = vpop.f32.mrb[0].mxu0
        %v1171 = vpop.f32.mrb[0].mxu0
        %1172 = vdwg.mxu0
        %v1173 = vadd.f32 %v1167, %v765
        %v1174 = vadd.f32 %v1169, %v766
        %1175 = vst [vmem:[%s349] sm:$0xff] %v1173
        %1176 = vst [vmem:[%s349 + $0x8] sm:$0xff] %v1174
        %s1177 = smul.u32 2, %s21
        %p1178 = scmp.lt.s32.totalorder %s1177, 3
        %s1179 = scalar_select %p1178, %s1177, 3
        %s1180 = smul.addr %s1179, 8
        %s1181 = scalar_lea.vmem %s9, %s1180
        // Predicated region
        $region61: #{residual_forward_nchw.1} parent=55 // pred_check
          %p1182 = pneg %p233
        $region62: #{residual_forward_nchw.1} parent=55 // pred_check_branch
          %1184 = sbr.rel (%p1182) target = $region64
        $region63: #{residual_forward_nchw.1} parent=55 // pred_region
          %s1185 = smul.u32 2, %s21
        $region64: #{residual_forward_nchw.1} parent=55 // pred_fallthru
          _
      $region56: #{residual_forward_nchw.1} parent=5 // pred_fallthru
        _
      %p1186 = scmp.le.s32.totalorder 2, %s16
      // Predicated region
      $region65: #{residual_forward_nchw.1} parent=5 // pred_check
        %p1187 = pneg %p1186
      $region66: #{residual_forward_nchw.1} parent=5 // pred_check_branch
        %1189 = sbr.rel (%p1187) target = $region68
      $region67: #{residual_forward_nchw.1} parent=5 // pred_region
        %s1190 = ssub.s32 %s16, 2
        // Predicated region
        $region69: #{residual_forward_nchw.1} parent=67 // pred_check
          %p1191 = pneg %p239
        $region70: #{residual_forward_nchw.1} parent=67 // pred_check_branch
          %1193 = sbr.rel (%p1191) target = $region72
        $region71: #{residual_forward_nchw.1} parent=67 // pred_region
          %s1194 = smul.u32 2, %s22
          %p1195 = scmp.lt.s32.totalorder %s1194, 3
          %s1196 = scalar_select %p1195, %s1194, 3
          %s1197 = smul.addr %s1196, 8
          %s1198 = scalar_lea.vmem %s9, %s1197
        $region72: #{residual_forward_nchw.1} parent=67 // pred_fallthru
          _
      $region68: #{residual_forward_nchw.1} parent=5 // pred_fallthru
        _
    $region6: #{residual_forward_nchw.1} parent=1 // loop_footer
      %s20 = sadd.s32 1, %s16
    $region7: #{residual_forward_nchw.1} parent=1 // loop_footer_branch
      %15 = sbr.rel target = $region3
    $region8: #{residual_forward_nchw.1} parent=1 // loop_exit
      _
    %1199 = vsyncpa [#allocation3], 1
    %s1200 = scalar_lea.sflag [#allocation3], 1
    %1201 = vsyncpa %s1200, 1

</llo_original>
